<compile_context>
chip_gen: v7x
topology: tpu7x:2x2x1
jax: 0.10.0
libtpu: 0.0.40
codegen_flags: <defaults>
</compile_context>

<pallas_src>
import functools

import jax
import jax.numpy as jnp
from jax.experimental import pallas as pl
from jax.experimental.pallas import tpu as pltpu


def _instance_attention_kernel(x_ref, w1_ref, b1_ref, w2_ref, b2_ref, w3_ref, b3_ref,
                               ctx_ref, attn_ref, m_ref, l_ref, acc_ref,
                               *, n, tile_n, num_tiles, has_padding):
    i = pl.program_id(0)

    @pl.when(i == 0)
    def _init():
        m_ref[...] = jnp.full(m_ref.shape, -jnp.inf, m_ref.dtype)
        l_ref[...] = jnp.zeros_like(l_ref)
        acc_ref[...] = jnp.zeros_like(acc_ref)

    x = x_ref[...]                                                       # (tile_n, D) bf16

    # fc: Linear + ReLU (Dropout is identity at inference). bf16 MXU, f32 accumulation.
    h = jnp.dot(x, w1_ref[...], preferred_element_type=jnp.float32) + b1_ref[...]
    h = jnp.maximum(h, 0.0)                                              # (tile_n, H) f32

    # attention_net: Linear + Tanh. bf16 operands, f32 accumulation; u stays f32.
    u = jnp.tanh(jnp.dot(h.astype(jnp.bfloat16), w2_ref[...],
                         preferred_element_type=jnp.float32) + b2_ref[...])

    # Score ROW on the MXU: (1, H) x (tile_n, H)^T -> (1, tile_n); + b3 scalar (SMEM).
    s = jax.lax.dot_general(w3_ref[...], u.astype(jnp.bfloat16),
                            (((1,), (1,)), ((), ())),
                            preferred_element_type=jnp.float32) + b3_ref[0, 0]

    if has_padding:
        # Only the padded tail of the last tile needs masking; skip entirely when
        # n % tile_n == 0 (static).
        lane = jax.lax.broadcasted_iota(jnp.int32, (1, tile_n), 1) + i * tile_n
        s = jnp.where(lane < n, s, -1e30)

    # Stage raw scores into row i of the resident, lane-dense attention output block.
    attn_ref[pl.ds(i, 1), :] = s

    # Online softmax update over the instance axis (row-oriented: lane reductions).
    m_old = m_ref[...]                                                   # (1, 1)
    m_new = jnp.maximum(m_old, jnp.max(s, axis=-1, keepdims=True))
    alpha = jnp.exp(m_old - m_new)
    p = jnp.exp(s - m_new)                                               # (1, tile_n); 0 at padding
    l_ref[...] = alpha * l_ref[...] + jnp.sum(p, axis=-1, keepdims=True)
    # Weighted-h accumulation on the MXU: (1, tile_n) x (tile_n, H) -> (1, H).
    acc_ref[...] = alpha * acc_ref[...] + jnp.dot(p, h, preferred_element_type=jnp.float32)
    m_ref[...] = m_new

    @pl.when(i == num_tiles - 1)
    def _finalize():
        inv_l = 1.0 / l_ref[...]                                         # exact; (1, 1) scalar
        ctx_ref[...] = acc_ref[...] * inv_l                              # (1, H)
        attn_ref[...] = jnp.exp(attn_ref[...] - m_ref[...]) * inv_l      # normalized attention


def instance_attention(x, w1, b1, w2, b2, w3, b3, *, tile_n=1024):
    """x: (N, input_dim) f32. w1: (input_dim, H); b1, b2: (1, H); w2: (H, H);
    w3: (1, H) (same layout as nn.Linear(H, 1).weight); b3: (1, 1).
    Returns (context_vector (H,), attention_scores (N, 1))."""
    n, d = x.shape
    hidden = w1.shape[1]

    # Tile size: multiple of 128 (lane-dense attn rows, MXU-friendly), no larger than needed.
    # Large default amortizes the ~0.35us per-grid-step overhead; on v7x budget VMEM
    # (x double-buffer + resident weights + the resident attn block) before raising it.
    n_up = pl.cdiv(n, 128) * 128
    tile_n = max(128, (min(tile_n, n_up) // 128) * 128)
    num_tiles = pl.cdiv(n, tile_n)
    n_pad = num_tiles * tile_n
    has_padding = n_pad != n

    # bf16 matmul operands (f32 accumulation in-kernel); halves the streamed x HBM traffic.
    x = x.astype(jnp.bfloat16)
    if has_padding:
        x = jnp.pad(x, ((0, n_pad - n), (0, 0)))
    w1 = w1.astype(jnp.bfloat16)
    w2 = w2.astype(jnp.bfloat16)
    w3 = w3.astype(jnp.bfloat16)

    kernel = functools.partial(_instance_attention_kernel,
                               n=n, tile_n=tile_n, num_tiles=num_tiles,
                               has_padding=has_padding)

    flops = (2 * n_pad * d * hidden + 2 * n_pad * hidden * hidden
             + 4 * n_pad * hidden + 8 * n_pad)
    transcendentals = n_pad * hidden + 3 * n_pad
    bytes_accessed = (2 * (n_pad * d + d * hidden + hidden * hidden + hidden)
                      + 4 * (2 * hidden + 1 + hidden + num_tiles * tile_n))

    const = lambda i: (0, 0)
    ctx, attn_mat = pl.pallas_call(
        kernel,
        grid=(num_tiles,),
        in_specs=[
            pl.BlockSpec((tile_n, d), lambda i: (i, 0)),          # x: streamed instance tiles
            pl.BlockSpec((d, hidden), const),                     # W1 (resident, bf16)
            pl.BlockSpec((1, hidden), const),                     # b1 (resident, f32)
            pl.BlockSpec((hidden, hidden), const),                # W2 (resident, bf16)
            pl.BlockSpec((1, hidden), const),                     # b2 (resident, f32)
            pl.BlockSpec((1, hidden), const),                     # w3 row (resident, bf16)
            pl.BlockSpec(memory_space=pltpu.MemorySpace.SMEM),    # b3 scalar in SMEM
        ],
        out_specs=(
            pl.BlockSpec((1, hidden), const),                     # ctx (resident accumulator)
            pl.BlockSpec((num_tiles, tile_n), const),             # attn (resident, lane-dense)
        ),
        out_shape=(
            jax.ShapeDtypeStruct((1, hidden), jnp.float32),
            jax.ShapeDtypeStruct((num_tiles, tile_n), jnp.float32),
        ),
        scratch_shapes=[
            pltpu.VMEM((1, 1), jnp.float32),                      # running max m
            pltpu.VMEM((1, 1), jnp.float32),                      # running denominator l
            pltpu.VMEM((1, hidden), jnp.float32),                 # running sum(exp(s)*h)
        ],
        compiler_params=pltpu.CompilerParams(
            dimension_semantics=("arbitrary",),                   # softmax reduction axis
            vmem_limit_bytes=32 * 1024 * 1024),
        cost_estimate=pl.CostEstimate(flops=flops,
                                      transcendentals=transcendentals,
                                      bytes_accessed=bytes_accessed),
    )(x, w1, b1, w2, b2, w3, b3)

    attn = attn_mat.reshape(n_pad, 1)[:n]
    return ctx[0], attn


def init_params(key, input_dim, hidden_dim):
    """Deterministic synthetic parameters with nn.Linear-like scaling."""
    k1, k2, k3, k4, k5, k6 = jax.random.split(key, 6)
    s1 = 1.0 / jnp.sqrt(input_dim)
    s2 = 1.0 / jnp.sqrt(hidden_dim)
    w1 = jax.random.uniform(k1, (input_dim, hidden_dim), jnp.float32, -s1, s1)
    b1 = jax.random.uniform(k2, (1, hidden_dim), jnp.float32, -s1, s1)
    w2 = jax.random.uniform(k3, (hidden_dim, hidden_dim), jnp.float32, -s2, s2)
    b2 = jax.random.uniform(k4, (1, hidden_dim), jnp.float32, -s2, s2)
    w3 = jax.random.uniform(k5, (1, hidden_dim), jnp.float32, -s2, s2)  # == Linear(H,1).weight
    b3 = jax.random.uniform(k6, (1, 1), jnp.float32, -s2, s2)
    return w1, b1, w2, b2, w3, b3


def reference(x, w1, b1, w2, b2, w3, b3):
    h = jnp.maximum(x @ w1 + b1, 0.0)
    s = jnp.tanh(h @ w2 + b2) @ w3.T + b3
    attn = jax.nn.softmax(s, axis=0)
    return jnp.sum(attn * h, axis=0), attn


if __name__ == "__main__":
    # Module defaults input_dim=512, hidden_dim=256; N=300 instances so that
    # tile_n=128 exercises a 3-step grid plus instance-axis padding/masking.
    N, INPUT_DIM, HIDDEN_DIM = 300, 512, 256

    key = jax.random.PRNGKey(0)
    kx, kp = jax.random.split(key)
    x = jax.random.normal(kx, (N, INPUT_DIM), jnp.float32)
    params = init_params(kp, INPUT_DIM, HIDDEN_DIM)

    ctx, attn = instance_attention(x, *params, tile_n=128)
    jax.block_until_ready((ctx, attn))

    ctx_exp, attn_exp = reference(x, *params)
    assert ctx.shape == (HIDDEN_DIM,)
    assert attn.shape == (N, 1)
    # Tolerances account for bf16 matmul operands (f32 accumulation) vs f32 reference.
    assert jnp.allclose(ctx, ctx_exp, atol=2e-2, rtol=2e-2), \
        float(jnp.max(jnp.abs(ctx - ctx_exp)))
    assert jnp.allclose(attn, attn_exp, atol=2e-4, rtol=2e-2), \
        float(jnp.max(jnp.abs(attn - attn_exp)))
    # Exact reciprocal in the softmax normalization -> tight sum-to-one.
    assert jnp.allclose(jnp.sum(attn), 1.0, atol=1e-4)

    print("KERNEL_OK")
</pallas_src>

<mosaic_0001>
module attributes {stable_mosaic.version = 11 : i64} {
  func.func @_instance_attention_kernel(%arg0: i32, %arg1: memref<128x512xbf16, #tpu.memory_space<vmem>>, %arg2: memref<512x256xbf16, #tpu.memory_space<vmem>>, %arg3: memref<1x256xf32, #tpu.memory_space<vmem>>, %arg4: memref<256x256xbf16, #tpu.memory_space<vmem>>, %arg5: memref<1x256xf32, #tpu.memory_space<vmem>>, %arg6: memref<1x256xbf16, #tpu.memory_space<vmem>>, %arg7: memref<1x1xf32, #tpu.memory_space<smem>>, %arg8: memref<1x256xf32, #tpu.memory_space<vmem>>, %arg9: memref<3x128xf32, #tpu.memory_space<vmem>>, %arg10: memref<1x1xf32, #tpu.memory_space<vmem>>, %arg11: memref<1x1xf32, #tpu.memory_space<vmem>>, %arg12: memref<1x256xf32, #tpu.memory_space<vmem>>) attributes {dimension_semantics = [#tpu.dimension_semantics<arbitrary>], iteration_bounds = array<i64: 3>, scalar_prefetch = 0 : i64, scratch_operands = 3 : i64, tpu.core_type = #tpu.core_type<tc>, window_params = [{transform_indices = @transform_0, window_bounds = array<i64: 128, 512>}, {pipeline_mode = #tpu.pipeline_mode<synchronous>, transform_indices = @transform_1, window_bounds = array<i64: 512, 256>}, {pipeline_mode = #tpu.pipeline_mode<synchronous>, transform_indices = @transform_2, window_bounds = array<i64: 1, 256>}, {pipeline_mode = #tpu.pipeline_mode<synchronous>, transform_indices = @transform_3, window_bounds = array<i64: 256, 256>}, {pipeline_mode = #tpu.pipeline_mode<synchronous>, transform_indices = @transform_4, window_bounds = array<i64: 1, 256>}, {pipeline_mode = #tpu.pipeline_mode<synchronous>, transform_indices = @transform_5, window_bounds = array<i64: 1, 256>}, {transform_indices = @transform_6, window_bounds = array<i64: 1, 1>}, {pipeline_mode = #tpu.pipeline_mode<synchronous>, transform_indices = @transform_7, window_bounds = array<i64: 1, 256>}, {pipeline_mode = #tpu.pipeline_mode<synchronous>, transform_indices = @transform_8, window_bounds = array<i64: 3, 128>}]} {
    %c0_i32 = arith.constant 0 : i32
    %0 = arith.cmpi eq, %arg0, %c0_i32 : i32
    %1 = arith.extui %0 : i1 to i32
    %c0_i32_0 = arith.constant 0 : i32
    %2 = arith.cmpi ne, %1, %c0_i32_0 : i32
    scf.if %2 {
      %cst_35 = arith.constant 0xFF800000 : f32
      %59 = vector.broadcast %cst_35 : f32 to vector<1x1xf32>
      %c0_36 = arith.constant 0 : index
      %c0_37 = arith.constant 0 : index
      %60 = vector.load %arg10[%c0_36, %c0_37] : memref<1x1xf32, #tpu.memory_space<vmem>>, vector<1x1xf32>
      tpu.vector_store %arg10[%c0_36, %c0_37], %59 {strides = array<i32>} : memref<1x1xf32, #tpu.memory_space<vmem>>, vector<1x1xf32>,
      %cst_38 = arith.constant 0.000000e+00 : f32
      %61 = vector.broadcast %cst_38 : f32 to vector<1x1xf32>
      %c0_39 = arith.constant 0 : index
      %c0_40 = arith.constant 0 : index
      %62 = vector.load %arg11[%c0_39, %c0_40] : memref<1x1xf32, #tpu.memory_space<vmem>>, vector<1x1xf32>
      tpu.vector_store %arg11[%c0_39, %c0_40], %61 {strides = array<i32>} : memref<1x1xf32, #tpu.memory_space<vmem>>, vector<1x1xf32>,
      %cst_41 = arith.constant 0.000000e+00 : f32
      %63 = vector.broadcast %cst_41 : f32 to vector<1x256xf32>
      %c0_42 = arith.constant 0 : index
      %c0_43 = arith.constant 0 : index
      %64 = vector.load %arg12[%c0_42, %c0_43] : memref<1x256xf32, #tpu.memory_space<vmem>>, vector<1x256xf32>
      tpu.vector_store %arg12[%c0_42, %c0_43], %63 {strides = array<i32>} : memref<1x256xf32, #tpu.memory_space<vmem>>, vector<1x256xf32>,
    } else {
    }
    %c0 = arith.constant 0 : index
    %c0_1 = arith.constant 0 : index
    %3 = vector.load %arg1[%c0, %c0_1] : memref<128x512xbf16, #tpu.memory_space<vmem>>, vector<128x512xbf16>
    %c0_2 = arith.constant 0 : index
    %c0_3 = arith.constant 0 : index
    %4 = vector.load %arg2[%c0_2, %c0_3] : memref<512x256xbf16, #tpu.memory_space<vmem>>, vector<512x256xbf16>
    %cst = arith.constant dense<0.000000e+00> : vector<128x256xf32>
    %5 = tpu.matmul %3, %4, %cst {dimension_numbers = #tpu.dot_dimension_numbers<[1], [0], [0], [1], [0, 0, 1, 1], [], []>} : vector<128x512xbf16>, vector<512x256xbf16>, vector<128x256xf32> -> vector<128x256xf32>
    %c0_4 = arith.constant 0 : index
    %c0_5 = arith.constant 0 : index
    %6 = vector.load %arg3[%c0_4, %c0_5] : memref<1x256xf32, #tpu.memory_space<vmem>>, vector<1x256xf32>
    %7 = vector.broadcast %6 : vector<1x256xf32> to vector<128x256xf32>
    %8 = arith.addf %5, %7 : vector<128x256xf32>
    %cst_6 = arith.constant 0.000000e+00 : f32
    %9 = vector.broadcast %cst_6 : f32 to vector<128x256xf32>
    %10 = arith.maximumf %8, %9 : vector<128x256xf32>
    %11 = arith.truncf %10 : vector<128x256xf32> to vector<128x256xbf16>
    %c0_7 = arith.constant 0 : index
    %c0_8 = arith.constant 0 : index
    %12 = vector.load %arg4[%c0_7, %c0_8] : memref<256x256xbf16, #tpu.memory_space<vmem>>, vector<256x256xbf16>
    %cst_9 = arith.constant dense<0.000000e+00> : vector<128x256xf32>
    %13 = tpu.matmul %11, %12, %cst_9 {dimension_numbers = #tpu.dot_dimension_numbers<[1], [0], [0], [1], [0, 0, 1, 1], [], []>} : vector<128x256xbf16>, vector<256x256xbf16>, vector<128x256xf32> -> vector<128x256xf32>
    %c0_10 = arith.constant 0 : index
    %c0_11 = arith.constant 0 : index
    %14 = vector.load %arg5[%c0_10, %c0_11] : memref<1x256xf32, #tpu.memory_space<vmem>>, vector<1x256xf32>
    %15 = vector.broadcast %14 : vector<1x256xf32> to vector<128x256xf32>
    %16 = arith.addf %13, %15 : vector<128x256xf32>
    %17 = math.tanh %16 : vector<128x256xf32>
    %c0_12 = arith.constant 0 : index
    %c0_13 = arith.constant 0 : index
    %18 = vector.load %arg6[%c0_12, %c0_13] : memref<1x256xbf16, #tpu.memory_space<vmem>>, vector<1x256xbf16>
    %19 = arith.truncf %17 : vector<128x256xf32> to vector<128x256xbf16>
    %cst_14 = arith.constant dense<0.000000e+00> : vector<1x128xf32>
    %20 = tpu.matmul %18, %19, %cst_14 {dimension_numbers = #tpu.dot_dimension_numbers<[1], [1], [0], [0], [0, 0, 1, 0], [], []>} : vector<1x256xbf16>, vector<128x256xbf16>, vector<1x128xf32> -> vector<1x128xf32>
    %c0_15 = arith.constant 0 : index
    %c0_16 = arith.constant 0 : index
    %21 = memref.load %arg7[%c0_15, %c0_16] : memref<1x1xf32, #tpu.memory_space<smem>>
    %22 = vector.broadcast %21 : f32 to vector<1x128xf32>
    %23 = arith.addf %20, %22 : vector<1x128xf32>
    %24 = tpu.iota {dimensions = array<i32: 1>} : vector<1x128xi32>
    %c128_i32 = arith.constant 128 : i32
    %25 = arith.muli %arg0, %c128_i32 : i32
    %26 = vector.broadcast %25 : i32 to vector<1x128xi32>
    %27 = arith.addi %24, %26 : vector<1x128xi32>
    %c300_i32 = arith.constant 300 : i32
    %28 = vector.broadcast %c300_i32 : i32 to vector<1x128xi32>
    %29 = arith.cmpi slt, %27, %28 : vector<1x128xi32>
    %cst_17 = arith.constant -1.000000e+30 : f32
    %30 = vector.broadcast %cst_17 : f32 to vector<1x128xf32>
    %31 = arith.select %29, %23, %30 : vector<1x128xi1>, vector<1x128xf32>
    %32 = arith.index_cast %arg0 : i32 to index
    %c0_18 = arith.constant 0 : index
    %33 = vector.load %arg9[%32, %c0_18] : memref<3x128xf32, #tpu.memory_space<vmem>>, vector<1x128xf32>
    tpu.vector_store %arg9[%32, %c0_18], %31 {strides = array<i32>} : memref<3x128xf32, #tpu.memory_space<vmem>>, vector<1x128xf32>,
    %c0_19 = arith.constant 0 : index
    %c0_20 = arith.constant 0 : index
    %34 = vector.load %arg10[%c0_19, %c0_20] : memref<1x1xf32, #tpu.memory_space<vmem>>, vector<1x1xf32>
    %cst_21 = arith.constant dense<0xFF800000> : vector<1xf32>
    %35 = vector.multi_reduction <maximumf>, %31, %cst_21 [1] : vector<1x128xf32> to vector<1xf32>
    %36 = vector.shape_cast %35 : vector<1xf32> to vector<1x1xf32>
    %37 = arith.maximumf %34, %36 : vector<1x1xf32>
    %38 = arith.subf %34, %37 : vector<1x1xf32>
    %39 = math.exp %38 : vector<1x1xf32>
    %40 = vector.broadcast %37 : vector<1x1xf32> to vector<1x128xf32>
    %41 = arith.subf %31, %40 : vector<1x128xf32>
    %42 = math.exp %41 : vector<1x128xf32>
    %c0_22 = arith.constant 0 : index
    %c0_23 = arith.constant 0 : index
    %43 = vector.load %arg11[%c0_22, %c0_23] : memref<1x1xf32, #tpu.memory_space<vmem>>, vector<1x1xf32>
    %44 = arith.mulf %39, %43 : vector<1x1xf32>
    %cst_24 = arith.constant dense<0.000000e+00> : vector<1xf32>
    %45 = vector.multi_reduction <add>, %42, %cst_24 [1] : vector<1x128xf32> to vector<1xf32>
    %46 = vector.shape_cast %45 : vector<1xf32> to vector<1x1xf32>
    %47 = arith.addf %44, %46 : vector<1x1xf32>
    %c0_25 = arith.constant 0 : index
    %c0_26 = arith.constant 0 : index
    %48 = vector.load %arg11[%c0_25, %c0_26] : memref<1x1xf32, #tpu.memory_space<vmem>>, vector<1x1xf32>
    tpu.vector_store %arg11[%c0_25, %c0_26], %47 {strides = array<i32>} : memref<1x1xf32, #tpu.memory_space<vmem>>, vector<1x1xf32>,
    %c0_27 = arith.constant 0 : index
    %c0_28 = arith.constant 0 : index
    %49 = vector.load %arg12[%c0_27, %c0_28] : memref<1x256xf32, #tpu.memory_space<vmem>>, vector<1x256xf32>
    %50 = vector.broadcast %39 : vector<1x1xf32> to vector<1x256xf32>
    %51 = arith.mulf %50, %49 : vector<1x256xf32>
    %cst_29 = arith.constant dense<0.000000e+00> : vector<1x256xf32>
    %52 = tpu.matmul %42, %10, %cst_29 {dimension_numbers = #tpu.dot_dimension_numbers<[1], [0], [0], [1], [0, 0, 1, 1], [], []>} : vector<1x128xf32>, vector<128x256xf32>, vector<1x256xf32> -> vector<1x256xf32>
    %53 = arith.addf %51, %52 : vector<1x256xf32>
    %c0_30 = arith.constant 0 : index
    %c0_31 = arith.constant 0 : index
    %54 = vector.load %arg12[%c0_30, %c0_31] : memref<1x256xf32, #tpu.memory_space<vmem>>, vector<1x256xf32>
    tpu.vector_store %arg12[%c0_30, %c0_31], %53 {strides = array<i32>} : memref<1x256xf32, #tpu.memory_space<vmem>>, vector<1x256xf32>,
    %c0_32 = arith.constant 0 : index
    %c0_33 = arith.constant 0 : index
    %55 = vector.load %arg10[%c0_32, %c0_33] : memref<1x1xf32, #tpu.memory_space<vmem>>, vector<1x1xf32>
    tpu.vector_store %arg10[%c0_32, %c0_33], %37 {strides = array<i32>} : memref<1x1xf32, #tpu.memory_space<vmem>>, vector<1x1xf32>,
    %c2_i32 = arith.constant 2 : i32
    %56 = arith.cmpi eq, %arg0, %c2_i32 : i32
    %57 = arith.extui %56 : i1 to i32
    %c0_i32_34 = arith.constant 0 : i32
    %58 = arith.cmpi ne, %57, %c0_i32_34 : i32
    scf.if %58 {
      %c0_35 = arith.constant 0 : index
      %c0_36 = arith.constant 0 : index
      %59 = vector.load %arg11[%c0_35, %c0_36] : memref<1x1xf32, #tpu.memory_space<vmem>>, vector<1x1xf32>
      %cst_37 = arith.constant 1.000000e+00 : f32
      %60 = vector.broadcast %cst_37 : f32 to vector<1x1xf32>
      %61 = arith.divf %60, %59 : vector<1x1xf32>
      %c0_38 = arith.constant 0 : index
      %c0_39 = arith.constant 0 : index
      %62 = vector.load %arg12[%c0_38, %c0_39] : memref<1x256xf32, #tpu.memory_space<vmem>>, vector<1x256xf32>
      %63 = vector.broadcast %61 : vector<1x1xf32> to vector<1x256xf32>
      %64 = arith.mulf %62, %63 : vector<1x256xf32>
      %c0_40 = arith.constant 0 : index
      %c0_41 = arith.constant 0 : index
      %65 = vector.load %arg8[%c0_40, %c0_41] : memref<1x256xf32, #tpu.memory_space<vmem>>, vector<1x256xf32>
      tpu.vector_store %arg8[%c0_40, %c0_41], %64 {strides = array<i32>} : memref<1x256xf32, #tpu.memory_space<vmem>>, vector<1x256xf32>,
      %c0_42 = arith.constant 0 : index
      %c0_43 = arith.constant 0 : index
      %66 = vector.load %arg9[%c0_42, %c0_43] : memref<3x128xf32, #tpu.memory_space<vmem>>, vector<3x128xf32>
      %c0_44 = arith.constant 0 : index
      %c0_45 = arith.constant 0 : index
      %67 = vector.load %arg10[%c0_44, %c0_45] : memref<1x1xf32, #tpu.memory_space<vmem>>, vector<1x1xf32>
      %68 = vector.broadcast %67 : vector<1x1xf32> to vector<3x128xf32>
      %69 = arith.subf %66, %68 : vector<3x128xf32>
      %70 = math.exp %69 : vector<3x128xf32>
      %71 = vector.broadcast %61 : vector<1x1xf32> to vector<3x128xf32>
      %72 = arith.mulf %70, %71 : vector<3x128xf32>
      %c0_46 = arith.constant 0 : index
      %c0_47 = arith.constant 0 : index
      %73 = vector.load %arg9[%c0_46, %c0_47] : memref<3x128xf32, #tpu.memory_space<vmem>>, vector<3x128xf32>
      tpu.vector_store %arg9[%c0_46, %c0_47], %72 {strides = array<i32>} : memref<3x128xf32, #tpu.memory_space<vmem>>, vector<3x128xf32>,
    } else {
    }
    return
  }
  func.func @transform_0(%arg0: i32) -> (i32, i32) {
    %c0_i32 = arith.constant 0 : i32
    %c0_i32_0 = arith.constant 0 : i32
    return %arg0, %c0_i32 : i32, i32
  }
  func.func @transform_1(%arg0: i32) -> (i32, i32) {
    %c0_i32 = arith.constant 0 : i32
    %c0_i32_0 = arith.constant 0 : i32
    %c0_i32_1 = arith.constant 0 : i32
    return %c0_i32, %c0_i32_0 : i32, i32
  }
  func.func @transform_2(%arg0: i32) -> (i32, i32) {
    %c0_i32 = arith.constant 0 : i32
    %c0_i32_0 = arith.constant 0 : i32
    %c0_i32_1 = arith.constant 0 : i32
    return %c0_i32, %c0_i32_0 : i32, i32
  }
  func.func @transform_3(%arg0: i32) -> (i32, i32) {
    %c0_i32 = arith.constant 0 : i32
    %c0_i32_0 = arith.constant 0 : i32
    %c0_i32_1 = arith.constant 0 : i32
    return %c0_i32, %c0_i32_0 : i32, i32
  }
  func.func @transform_4(%arg0: i32) -> (i32, i32) {
    %c0_i32 = arith.constant 0 : i32
    %c0_i32_0 = arith.constant 0 : i32
    %c0_i32_1 = arith.constant 0 : i32
    return %c0_i32, %c0_i32_0 : i32, i32
  }
  func.func @transform_5(%arg0: i32) -> (i32, i32) {
    %c0_i32 = arith.constant 0 : i32
    %c0_i32_0 = arith.constant 0 : i32
    %c0_i32_1 = arith.constant 0 : i32
    return %c0_i32, %c0_i32_0 : i32, i32
  }
  func.func @transform_6(%arg0: i32) -> (i32, i32) {
    %c0_i32 = arith.constant 0 : i32
    %c0_i32_0 = arith.constant 0 : i32
    %c0_i32_1 = arith.constant 0 : i32
    return %c0_i32, %c0_i32_0 : i32, i32
  }
  func.func @transform_7(%arg0: i32) -> (i32, i32) {
    %c0_i32 = arith.constant 0 : i32
    %c0_i32_0 = arith.constant 0 : i32
    %c0_i32_1 = arith.constant 0 : i32
    return %c0_i32, %c0_i32_0 : i32, i32
  }
  func.func @transform_8(%arg0: i32) -> (i32, i32) {
    %c0_i32 = arith.constant 0 : i32
    %c0_i32_0 = arith.constant 0 : i32
    %c0_i32_1 = arith.constant 0 : i32
    return %c0_i32, %c0_i32_0 : i32, i32
  }
}

</mosaic_0001>

<llo_original>
// kernel: tpu_custom_call.1
$region0: #{tpu_custom_call.1}
  #allocation0 [shape = 'u32[]', space=smem, size = 0x4, offset = 0x4, fixed_abs, tag = 'smem constant byte address 0x4 - core index']
  #allocation1 [shape = 'u32[144,128]{1,0:T(1,128)}', space=vmem, size = 0x12000, scoped, tag = 'internal scratch']
  #allocation2 [shape = 'f32[1,1]{1,0:T(1,128)}', space=vmem, size = 0x200, scoped, tag = 'scratch operand']
  #allocation3 [shape = 'f32[1,1]{1,0:T(1,128)}', space=vmem, size = 0x200, scoped, tag = 'scratch operand']
  #allocation4 [shape = 'f32[1,256]{1,0:T(1,128)}', space=vmem, size = 0x400, scoped, tag = 'scratch operand']
  #allocation5 [shape = 'f32[1,1]{1,0:T(1,128)S(6)}', space=smem, size = 0x200, scoped, tag = 'scoped memory for tpu_custom_call.1']
  %s0 = inlined_call_operand.hbm [shape: bf16[384,512], index: 0, kind: input, shape index: {}]
  %s1 = inlined_call_operand.hbm [shape: bf16[512,256], index: 1, kind: input, shape index: {}]
  %s2 = inlined_call_operand.vmem [shape: f32[1,256], index: 2, kind: input, shape index: {}]
  %s3 = inlined_call_operand.hbm [shape: bf16[256,256], index: 3, kind: input, shape index: {}]
  %s4 = inlined_call_operand.vmem [shape: f32[1,256], index: 4, kind: input, shape index: {}]
  %s5 = inlined_call_operand.vmem [shape: bf16[1,256], index: 5, kind: input, shape index: {}]
  %s6 = inlined_call_operand.<no memory space> [shape: f32[1,1], index: 6, kind: input, shape index: {}]
  %s7 = inlined_call_operand.hbm [shape: f32[1,256], index: 7, kind: output, shape index: {0}]
  %s8 = inlined_call_operand.hbm [shape: f32[3,128], index: 8, kind: output, shape index: {1}]
  %9 = xla_tuple %s7, %s8
  %s10 = sld [smem:[#allocation0]]
  $region89: #{tpu_custom_call.1} parent=0
    _
  %s12 = ssub.s32 1, %s10
  %s13 = scalar_select 0, %s12, %s10
  %14 = sst [smem:[#allocation5]] %s6
  $region1: #{tpu_custom_call.1} parent=0
    #allocation6 [shape = 'u8[262144]{0}', space=vmem, size = 0x40000, scoped, tag = 'input window, operand 0']
    #allocation7 [shape = 's32[2]{0}', space=sflag, size = 0x8, scoped, tag = 'scoped memory for tpu_custom_call.1']
    #allocation8 [shape = 's32[2]{0}', space=sflag, size = 0x8, scoped, tag = 'scoped memory for tpu_custom_call.1']
    #allocation9 [shape = 'u8[262144]{0}', space=vmem, size = 0x40000, scoped, tag = 'input window, operand 1, single buffered']
    #allocation10 [shape = 's32[1]{0}', space=sflag, size = 0x4, scoped, tag = 'scoped memory for tpu_custom_call.1']
    #allocation11 [shape = 'u8[131072]{0}', space=vmem, size = 0x20000, scoped, tag = 'input window, operand 3, single buffered']
    #allocation12 [shape = 'u8[1024]{0}', space=vmem, size = 0x400, scoped, tag = 'output window, operand 0, single buffered']
    #allocation13 [shape = 'u8[2048]{0}', space=vmem, size = 0x800, scoped, tag = 'output window, operand 1, single buffered']
    #allocation14 [shape = 's32[1]{0}', space=sflag, size = 0x4, scoped, tag = 'scoped memory for tpu_custom_call.1']
    %15 = vsyncpa [#allocation7], 0
    %s16 = scalar_lea.sflag [#allocation7], 1
    %17 = vsyncpa %s16, 0
    %18 = vsyncpa [#allocation10], 0
    %19 = vsyncpa [#allocation8], 0
    %20 = vsyncpa [#allocation14], 0
    loop: start=0, step=1, limit=5
    $region2: #{tpu_custom_call.1} parent=1 // loop_pre_header
      _
    $region3: #{tpu_custom_call.1} parent=1 // loop_header
      %s22 = sphi 0, %s26
      %p23 = scmp.ge.s32.totalorder %s22, 5
      %s32 = sphi 0, %s34
      %s35 = sphi 0, %s32
      %s36 = sphi 0, %s35
      %s52 = sphi 0, %s36
      %s56 = sphi 0, %s56
      %s58 = sphi 0, %s56
      %s59 = sphi 0, %s58
      %s73 = sphi 0, %s59
      %s77 = sphi 0, %s77
      %s79 = sphi 0, %s77
      %s80 = sphi 0, %s79
      %s94 = sphi 0, %s80
      %s98 = sphi 0, %s98
      %s100 = sphi 0, %s98
      %s101 = sphi 0, %s100
      %s115 = sphi 0, %s101
      %s119 = sphi 0, %s119
      %s121 = sphi 0, %s119
      %s122 = sphi 0, %s121
      %s136 = sphi 0, %s122
      %s140 = sphi 0, %s140
      %s142 = sphi 0, %s140
      %s143 = sphi 0, %s142
      %s157 = sphi 0, %s143
      %s161 = sphi 0, %s161
      %s163 = sphi 0, %s161
      %s164 = sphi 0, %s163
      %s178 = sphi 0, %s164
      %s182 = sphi 0, %s182
      %s184 = sphi 0, %s182
      %s185 = sphi 0, %s184
      %s199 = sphi 0, %s185
      %s203 = sphi 0, %s203
      %s205 = sphi 0, %s203
      %s206 = sphi 0, %s205
      %s220 = sphi 0, %s206
    $region4: #{tpu_custom_call.1} parent=1 // loop_header_branch
      %25 = sbr.rel (%p23) target = $region8
    $region5: #{tpu_custom_call.1} parent=1 // loop_body
      %s27 = ssub.s32 %s22, 1
      %s28 = ssub.s32 %s22, 2
      %s29 = sadd.s32 %s22, 1
      %s30 = ssub.s32 %s22, %s29
      %p31 = scmp.eq.s32.totalorder %s30, 0
      %s33 = sadd.s32 %s32, 1
      %s34 = scalar_select %p31, %s32, %s33
      %p37 = pneg %p31
      %p38 = scmp.eq.s32.totalorder %s22, 2
      %p39 = por %p37, %p38
      %p40 = scmp.ne.s32.totalorder %s32, %s35
      %p41 = scmp.eq.s32.totalorder %s22, 0
      %p42 = por %p40, %p41
      %p43 = scmp.ne.s32.totalorder %s32, %s35
      %p44 = scmp.eq.s32.totalorder %s27, 2
      %p45 = por %p43, %p44
      %p46 = scmp.ne.s32.totalorder %s35, %s36
      %p47 = scmp.eq.s32.totalorder %s27, 0
      %p48 = por %p46, %p47
      %p49 = scmp.ne.s32.totalorder %s35, %s36
      %p50 = scmp.eq.s32.totalorder %s28, 2
      %p51 = por %p49, %p50
      %p53 = scmp.ne.s32.totalorder %s36, %s52
      %p54 = scmp.eq.s32.totalorder %s28, 0
      %p55 = por %p53, %p54
      %s57 = sadd.s32 %s56, 1
      %p60 = scmp.eq.s32.totalorder %s22, 2
      %p61 = scmp.ne.s32.totalorder %s56, %s58
      %p62 = scmp.eq.s32.totalorder %s22, 0
      %p63 = por %p61, %p62
      %p64 = scmp.ne.s32.totalorder %s56, %s58
      %p65 = scmp.eq.s32.totalorder %s27, 2
      %p66 = por %p64, %p65
      %p67 = scmp.ne.s32.totalorder %s58, %s59
      %p68 = scmp.eq.s32.totalorder %s27, 0
      %p69 = por %p67, %p68
      %p70 = scmp.ne.s32.totalorder %s58, %s59
      %p71 = scmp.eq.s32.totalorder %s28, 2
      %p72 = por %p70, %p71
      %p74 = scmp.ne.s32.totalorder %s59, %s73
      %p75 = scmp.eq.s32.totalorder %s28, 0
      %p76 = por %p74, %p75
      %s78 = sadd.s32 %s77, 1
      %p81 = scmp.eq.s32.totalorder %s22, 2
      %p82 = scmp.ne.s32.totalorder %s77, %s79
      %p83 = scmp.eq.s32.totalorder %s22, 0
      %p84 = por %p82, %p83
      %p85 = scmp.ne.s32.totalorder %s77, %s79
      %p86 = scmp.eq.s32.totalorder %s27, 2
      %p87 = por %p85, %p86
      %p88 = scmp.ne.s32.totalorder %s79, %s80
      %p89 = scmp.eq.s32.totalorder %s27, 0
      %p90 = por %p88, %p89
      %p91 = scmp.ne.s32.totalorder %s79, %s80
      %p92 = scmp.eq.s32.totalorder %s28, 2
      %p93 = por %p91, %p92
      %p95 = scmp.ne.s32.totalorder %s80, %s94
      %p96 = scmp.eq.s32.totalorder %s28, 0
      %p97 = por %p95, %p96
      %s99 = sadd.s32 %s98, 1
      %p102 = scmp.eq.s32.totalorder %s22, 2
      %p103 = scmp.ne.s32.totalorder %s98, %s100
      %p104 = scmp.eq.s32.totalorder %s22, 0
      %p105 = por %p103, %p104
      %p106 = scmp.ne.s32.totalorder %s98, %s100
      %p107 = scmp.eq.s32.totalorder %s27, 2
      %p108 = por %p106, %p107
      %p109 = scmp.ne.s32.totalorder %s100, %s101
      %p110 = scmp.eq.s32.totalorder %s27, 0
      %p111 = por %p109, %p110
      %p112 = scmp.ne.s32.totalorder %s100, %s101
      %p113 = scmp.eq.s32.totalorder %s28, 2
      %p114 = por %p112, %p113
      %p116 = scmp.ne.s32.totalorder %s101, %s115
      %p117 = scmp.eq.s32.totalorder %s28, 0
      %p118 = por %p116, %p117
      %s120 = sadd.s32 %s119, 1
      %p123 = scmp.eq.s32.totalorder %s22, 2
      %p124 = scmp.ne.s32.totalorder %s119, %s121
      %p125 = scmp.eq.s32.totalorder %s22, 0
      %p126 = por %p124, %p125
      %p127 = scmp.ne.s32.totalorder %s119, %s121
      %p128 = scmp.eq.s32.totalorder %s27, 2
      %p129 = por %p127, %p128
      %p130 = scmp.ne.s32.totalorder %s121, %s122
      %p131 = scmp.eq.s32.totalorder %s27, 0
      %p132 = por %p130, %p131
      %p133 = scmp.ne.s32.totalorder %s121, %s122
      %p134 = scmp.eq.s32.totalorder %s28, 2
      %p135 = por %p133, %p134
      %p137 = scmp.ne.s32.totalorder %s122, %s136
      %p138 = scmp.eq.s32.totalorder %s28, 0
      %p139 = por %p137, %p138
      %s141 = sadd.s32 %s140, 1
      %p144 = scmp.eq.s32.totalorder %s22, 2
      %p145 = scmp.ne.s32.totalorder %s140, %s142
      %p146 = scmp.eq.s32.totalorder %s22, 0
      %p147 = por %p145, %p146
      %p148 = scmp.ne.s32.totalorder %s140, %s142
      %p149 = scmp.eq.s32.totalorder %s27, 2
      %p150 = por %p148, %p149
      %p151 = scmp.ne.s32.totalorder %s142, %s143
      %p152 = scmp.eq.s32.totalorder %s27, 0
      %p153 = por %p151, %p152
      %p154 = scmp.ne.s32.totalorder %s142, %s143
      %p155 = scmp.eq.s32.totalorder %s28, 2
      %p156 = por %p154, %p155
      %p158 = scmp.ne.s32.totalorder %s143, %s157
      %p159 = scmp.eq.s32.totalorder %s28, 0
      %p160 = por %p158, %p159
      %s162 = sadd.s32 %s161, 1
      %p165 = scmp.eq.s32.totalorder %s22, 2
      %p166 = scmp.ne.s32.totalorder %s161, %s163
      %p167 = scmp.eq.s32.totalorder %s22, 0
      %p168 = por %p166, %p167
      %p169 = scmp.ne.s32.totalorder %s161, %s163
      %p170 = scmp.eq.s32.totalorder %s27, 2
      %p171 = por %p169, %p170
      %p172 = scmp.ne.s32.totalorder %s163, %s164
      %p173 = scmp.eq.s32.totalorder %s27, 0
      %p174 = por %p172, %p173
      %p175 = scmp.ne.s32.totalorder %s163, %s164
      %p176 = scmp.eq.s32.totalorder %s28, 2
      %p177 = por %p175, %p176
      %p179 = scmp.ne.s32.totalorder %s164, %s178
      %p180 = scmp.eq.s32.totalorder %s28, 0
      %p181 = por %p179, %p180
      %s183 = sadd.s32 %s182, 1
      %p186 = scmp.eq.s32.totalorder %s22, 2
      %p187 = scmp.ne.s32.totalorder %s182, %s184
      %p188 = scmp.eq.s32.totalorder %s22, 0
      %p189 = por %p187, %p188
      %p190 = scmp.ne.s32.totalorder %s182, %s184
      %p191 = scmp.eq.s32.totalorder %s27, 2
      %p192 = por %p190, %p191
      %p193 = scmp.ne.s32.totalorder %s184, %s185
      %p194 = scmp.eq.s32.totalorder %s27, 0
      %p195 = por %p193, %p194
      %p196 = scmp.ne.s32.totalorder %s184, %s185
      %p197 = scmp.eq.s32.totalorder %s28, 2
      %p198 = por %p196, %p197
      %p200 = scmp.ne.s32.totalorder %s185, %s199
      %p201 = scmp.eq.s32.totalorder %s28, 0
      %p202 = por %p200, %p201
      %s204 = sadd.s32 %s203, 1
      %p207 = scmp.eq.s32.totalorder %s22, 2
      %p208 = scmp.ne.s32.totalorder %s203, %s205
      %p209 = scmp.eq.s32.totalorder %s22, 0
      %p210 = por %p208, %p209
      %p211 = scmp.ne.s32.totalorder %s203, %s205
      %p212 = scmp.eq.s32.totalorder %s27, 2
      %p213 = por %p211, %p212
      %p214 = scmp.ne.s32.totalorder %s205, %s206
      %p215 = scmp.eq.s32.totalorder %s27, 0
      %p216 = por %p214, %p215
      %p217 = scmp.ne.s32.totalorder %s205, %s206
      %p218 = scmp.eq.s32.totalorder %s28, 2
      %p219 = por %p217, %p218
      %p221 = scmp.ne.s32.totalorder %s206, %s220
      %p222 = scmp.eq.s32.totalorder %s28, 0
      %p223 = por %p221, %p222
      %p224 = scmp.le.s32.totalorder 1, %s22
      %p225 = scmp.lt.s32.totalorder %s22, 4
      %p226 = pnand %p224, %p225
      %p227 = pneg %p226
      // Predicated region
      $region9: #{tpu_custom_call.1} parent=5 // pred_check
        _
      $region10: #{tpu_custom_call.1} parent=5 // pred_check_branch
        %229 = sbr.rel (%p226) target = $region12
      $region11: #{tpu_custom_call.1} parent=5 // pred_region
        %s230 = ssub.s32 %s22, 1
        // Predicated region
        $region13: #{tpu_custom_call.1} parent=11 // pred_check
          %p231 = pneg %p69
        $region14: #{tpu_custom_call.1} parent=11 // pred_check_branch
          %233 = sbr.rel (%p231) target = $region16
        $region15: #{tpu_custom_call.1} parent=11 // pred_region
          %s235 = ssub.s32 8192, 8192
          %236 = vsyncadd [#allocation10], %s235
          %s237 = sshll.u32 [#allocation9], 4
          %s238 = int_to_ptr.vmem [resolvable:$true] %s237
          %243 = dma.hbm_to_vmem [thread:$0]  %s1, 8192, %s238, [#allocation10], 128, 128, 8
        $region16: #{tpu_custom_call.1} parent=11 // pred_fallthru
          _
        // Predicated region
        $region17: #{tpu_custom_call.1} parent=11 // pred_check
          %p244 = pneg %p90
        $region18: #{tpu_custom_call.1} parent=11 // pred_check_branch
          %246 = sbr.rel (%p244) target = $region20
        $region19: #{tpu_custom_call.1} parent=11 // pred_region
          _
        $region20: #{tpu_custom_call.1} parent=11 // pred_fallthru
          _
        // Predicated region
        $region21: #{tpu_custom_call.1} parent=11 // pred_check
          %p247 = pneg %p111
        $region22: #{tpu_custom_call.1} parent=11 // pred_check_branch
          %249 = sbr.rel (%p247) target = $region24
        $region23: #{tpu_custom_call.1} parent=11 // pred_region
          %s251 = ssub.s32 4096, 4096
          %252 = vsyncadd [#allocation10], %s251
          %s253 = sshll.u32 [#allocation11], 4
          %s254 = int_to_ptr.vmem [resolvable:$true] %s253
          %259 = dma.hbm_to_vmem [thread:$0]  %s3, 4096, %s254, [#allocation10], 128, 128, 8
        $region24: #{tpu_custom_call.1} parent=11 // pred_fallthru
          _
        // Predicated region
        $region25: #{tpu_custom_call.1} parent=11 // pred_check
          %p260 = pneg %p132
        $region26: #{tpu_custom_call.1} parent=11 // pred_check_branch
          %262 = sbr.rel (%p260) target = $region28
        $region27: #{tpu_custom_call.1} parent=11 // pred_region
          _
        $region28: #{tpu_custom_call.1} parent=11 // pred_fallthru
          _
        // Predicated region
        $region29: #{tpu_custom_call.1} parent=11 // pred_check
          %p263 = pneg %p153
        $region30: #{tpu_custom_call.1} parent=11 // pred_check_branch
          %265 = sbr.rel (%p263) target = $region32
        $region31: #{tpu_custom_call.1} parent=11 // pred_region
          _
        $region32: #{tpu_custom_call.1} parent=11 // pred_fallthru
          _
        // Predicated region
        $region33: #{tpu_custom_call.1} parent=11 // pred_check
          %p266 = pneg %p174
        $region34: #{tpu_custom_call.1} parent=11 // pred_check_branch
          %268 = sbr.rel (%p266) target = $region36
        $region35: #{tpu_custom_call.1} parent=11 // pred_region
          _
        $region36: #{tpu_custom_call.1} parent=11 // pred_fallthru
          _
      $region12: #{tpu_custom_call.1} parent=5 // pred_fallthru
        _
      %p269 = scmp.lt.s32.totalorder %s22, 3
      // Predicated region
      $region37: #{tpu_custom_call.1} parent=5 // pred_check
        %p270 = pneg %p269
      $region38: #{tpu_custom_call.1} parent=5 // pred_check_branch
        %272 = sbr.rel (%p270) target = $region40
      $region39: #{tpu_custom_call.1} parent=5 // pred_region
        // Predicated region
        $region41: #{tpu_custom_call.1} parent=39 // pred_check
          %p273 = pneg %p42
        $region42: #{tpu_custom_call.1} parent=39 // pred_check_branch
          %275 = sbr.rel (%p273) target = $region44
        $region43: #{tpu_custom_call.1} parent=39 // pred_region
          %s276 = sand.u32 %s32, 1
          %s277 = scalar_lea.sflag [#allocation7], %s276
          %s278 = sand.u32 %s32, 1
          %s279 = smul.addr %s278, 256
          %s280 = scalar_lea.vmem [#allocation6], %s279
          %s281 = smul.u32 16, %s22
          %s283 = ssub.s32 4096, 4096
          %284 = vsyncadd %s277, %s283
          %s285 = smul.addr %s281, 4
          %s286 = smul.addr %s285, 64
          %s287 = scalar_lea.hbm %s0, %s286
          %s288 = sshll.u32 %s280, 4
          %s289 = int_to_ptr.vmem [resolvable:$true] %s288
          %294 = dma.hbm_to_vmem [thread:$0]  %s287, 4096, %s289, %s277, 256, 256, 16
        $region44: #{tpu_custom_call.1} parent=39 // pred_fallthru
          _
      $region40: #{tpu_custom_call.1} parent=5 // pred_fallthru
        _
      %p295 = scmp.le.s32.totalorder 1, %s22
      %p296 = scmp.lt.s32.totalorder %s22, 4
      %p297 = pnand %p295, %p296
      %p298 = pneg %p297
      // Predicated region
      $region45: #{tpu_custom_call.1} parent=5 // pred_check
        _
      $region46: #{tpu_custom_call.1} parent=5 // pred_check_branch
        %300 = sbr.rel (%p297) target = $region48
      $region47: #{tpu_custom_call.1} parent=5 // pred_region
        %s301 = ssub.s32 %s22, 1
        %s302 = sand.u32 %s35, 1
        %s303 = scalar_lea.sflag [#allocation7], %s302
        %s304 = sand.u32 %s35, 1
        %s305 = smul.addr %s304, 256
        %s306 = scalar_lea.vmem [#allocation6], %s305
        // Predicated region
        $region49: #{tpu_custom_call.1} parent=47 // pred_check
          %p307 = pneg %p48
        $region50: #{tpu_custom_call.1} parent=47 // pred_check_branch
          %309 = sbr.rel (%p307) target = $region52
        $region51: #{tpu_custom_call.1} parent=47 // pred_region
          %310 = dma.done %s303, 4096
        $region52: #{tpu_custom_call.1} parent=47 // pred_fallthru
          _
        // Predicated region
        $region53: #{tpu_custom_call.1} parent=47 // pred_check
          %p311 = pneg %p69
        $region54: #{tpu_custom_call.1} parent=47 // pred_check_branch
          %313 = sbr.rel (%p311) target = $region56
        $region55: #{tpu_custom_call.1} parent=47 // pred_region
          %314 = dma.done [#allocation10], 8192
        $region56: #{tpu_custom_call.1} parent=47 // pred_fallthru
          _
        // Predicated region
        $region57: #{tpu_custom_call.1} parent=47 // pred_check
          %p315 = pneg %p111
        $region58: #{tpu_custom_call.1} parent=47 // pred_check_branch
          %317 = sbr.rel (%p315) target = $region60
        $region59: #{tpu_custom_call.1} parent=47 // pred_region
          %318 = dma.done [#allocation10], 4096
        $region60: #{tpu_custom_call.1} parent=47 // pred_fallthru
          _
        %s319 = sand.u32 %s35, 1
        %s320 = scalar_lea.sflag [#allocation7], %s319
        %s321 = sand.u32 %s35, 1
        %s322 = smul.addr %s321, 256
        %s323 = scalar_lea.vmem [#allocation6], %s322
        %p324 = pneg %p48
        %p325 = pneg %p45
        %p326 = pneg %p69
        %p327 = pneg %p66
        %p328 = pneg %p90
        %p329 = pneg %p87
        %p330 = pneg %p111
        %p331 = pneg %p108
        %p332 = pneg %p132
        %p333 = pneg %p129
        %p334 = pneg %p153
        %p335 = pneg %p150
        %p336 = pneg %p174
        %p337 = pneg %p171
        %p338 = pneg %p195
        %p339 = pneg %p192
        %p340 = pneg %p216
        %p341 = pneg %p213
        %s342 = smul.u32 16, %s27
        %p344 = scmp.eq.s32.totalorder %s27, 0
        // Predicated region
        $region61: #{tpu_custom_call.1} parent=47 // pred_check
          %p345 = pneg %p344
        $region62: #{tpu_custom_call.1} parent=47 // pred_check_branch
          %347 = sbr.rel (%p345) target = $region64
        $region63: #{tpu_custom_call.1} parent=47 // pred_region
          %vm348 = vcmask 0
          %349 = vst.msk [vmem:[#allocation2] sm:$0x1] %vm348, -inf
          %350 = vst.msk [vmem:[#allocation3] sm:$0x1] %vm348, 0.0
          %v351 = vlaneseq
          %vm352 = vcmp.ge.s32.totalorder %v351, 0
          %vm353 = vcmp.lt.s32.totalorder %v351, 256
          %vm354 = vmand %vm352, %vm353
          %355 = vst.msk [vmem:[#allocation4] sm:$0x3] %vm354, 0.0
        $region64: #{tpu_custom_call.1} parent=47 // pred_fallthru
          _
        %v356 = vld [vmem:[%s306] sm:$0xff]
        %v357 = vld [vmem:[%s306 + $0x8] sm:$0xff]
        %v358 = vld [vmem:[%s306 + $0x10] sm:$0xff]
        %v359 = vld [vmem:[%s306 + $0x18] sm:$0xff]
        %v360 = vld [vmem:[%s306 + $0x20] sm:$0xff]
        %v361 = vld [vmem:[%s306 + $0x28] sm:$0xff]
        %v362 = vld [vmem:[%s306 + $0x30] sm:$0xff]
        %v363 = vld [vmem:[%s306 + $0x38] sm:$0xff]
        %v364 = vld [vmem:[%s306 + $0x40] sm:$0xff]
        %v365 = vld [vmem:[%s306 + $0x48] sm:$0xff]
        %v366 = vld [vmem:[%s306 + $0x50] sm:$0xff]
        %v367 = vld [vmem:[%s306 + $0x58] sm:$0xff]
        %v368 = vld [vmem:[%s306 + $0x60] sm:$0xff]
        %v369 = vld [vmem:[%s306 + $0x68] sm:$0xff]
        %v370 = vld [vmem:[%s306 + $0x70] sm:$0xff]
        %v371 = vld [vmem:[%s306 + $0x78] sm:$0xff]
        %v372 = vld [vmem:[%s306 + $0x80] sm:$0xff]
        %v373 = vld [vmem:[%s306 + $0x88] sm:$0xff]
        %v374 = vld [vmem:[%s306 + $0x90] sm:$0xff]
        %v375 = vld [vmem:[%s306 + $0x98] sm:$0xff]
        %v376 = vld [vmem:[%s306 + $0xa0] sm:$0xff]
        %v377 = vld [vmem:[%s306 + $0xa8] sm:$0xff]
        %v378 = vld [vmem:[%s306 + $0xb0] sm:$0xff]
        %v379 = vld [vmem:[%s306 + $0xb8] sm:$0xff]
        %v380 = vld [vmem:[%s306 + $0xc0] sm:$0xff]
        %v381 = vld [vmem:[%s306 + $0xc8] sm:$0xff]
        %v382 = vld [vmem:[%s306 + $0xd0] sm:$0xff]
        %v383 = vld [vmem:[%s306 + $0xd8] sm:$0xff]
        %v384 = vld [vmem:[%s306 + $0xe0] sm:$0xff]
        %v385 = vld [vmem:[%s306 + $0xe8] sm:$0xff]
        %v386 = vld [vmem:[%s306 + $0xf0] sm:$0xff]
        %v387 = vld [vmem:[%s306 + $0xf8] sm:$0xff]
        %v388 = vld [vmem:[#allocation9] sm:$0xff]
        %v389 = vld [vmem:[#allocation9 + $0x8] sm:$0xff]
        %v390 = vld [vmem:[#allocation9 + $0x10] sm:$0xff]
        %v391 = vld [vmem:[#allocation9 + $0x18] sm:$0xff]
        %v392 = vld [vmem:[#allocation9 + $0x20] sm:$0xff]
        %v393 = vld [vmem:[#allocation9 + $0x28] sm:$0xff]
        %v394 = vld [vmem:[#allocation9 + $0x30] sm:$0xff]
        %v395 = vld [vmem:[#allocation9 + $0x38] sm:$0xff]
        %v396 = vld [vmem:[#allocation9 + $0x40] sm:$0xff]
        %v397 = vld [vmem:[#allocation9 + $0x48] sm:$0xff]
        %v398 = vld [vmem:[#allocation9 + $0x50] sm:$0xff]
        %v399 = vld [vmem:[#allocation9 + $0x58] sm:$0xff]
        %v400 = vld [vmem:[#allocation9 + $0x60] sm:$0xff]
        %v401 = vld [vmem:[#allocation9 + $0x68] sm:$0xff]
        %v402 = vld [vmem:[#allocation9 + $0x70] sm:$0xff]
        %v403 = vld [vmem:[#allocation9 + $0x78] sm:$0xff]
        %v404 = vld [vmem:[#allocation9 + $0x80] sm:$0xff]
        %v405 = vld [vmem:[#allocation9 + $0x88] sm:$0xff]
        %v406 = vld [vmem:[#allocation9 + $0x90] sm:$0xff]
        %v407 = vld [vmem:[#allocation9 + $0x98] sm:$0xff]
        %v408 = vld [vmem:[#allocation9 + $0xa0] sm:$0xff]
        %v409 = vld [vmem:[#allocation9 + $0xa8] sm:$0xff]
        %v410 = vld [vmem:[#allocation9 + $0xb0] sm:$0xff]
        %v411 = vld [vmem:[#allocation9 + $0xb8] sm:$0xff]
        %v412 = vld [vmem:[#allocation9 + $0xc0] sm:$0xff]
        %v413 = vld [vmem:[#allocation9 + $0xc8] sm:$0xff]
        %v414 = vld [vmem:[#allocation9 + $0xd0] sm:$0xff]
        %v415 = vld [vmem:[#allocation9 + $0xd8] sm:$0xff]
        %v416 = vld [vmem:[#allocation9 + $0xe0] sm:$0xff]
        %v417 = vld [vmem:[#allocation9 + $0xe8] sm:$0xff]
        %v418 = vld [vmem:[#allocation9 + $0xf0] sm:$0xff]
        %v419 = vld [vmem:[#allocation9 + $0xf8] sm:$0xff]
        %v420 = vld [vmem:[#allocation9 + $0x100] sm:$0xff]
        %v421 = vld [vmem:[#allocation9 + $0x108] sm:$0xff]
        %v422 = vld [vmem:[#allocation9 + $0x110] sm:$0xff]
        %v423 = vld [vmem:[#allocation9 + $0x118] sm:$0xff]
        %v424 = vld [vmem:[#allocation9 + $0x120] sm:$0xff]
        %v425 = vld [vmem:[#allocation9 + $0x128] sm:$0xff]
        %v426 = vld [vmem:[#allocation9 + $0x130] sm:$0xff]
        %v427 = vld [vmem:[#allocation9 + $0x138] sm:$0xff]
        %v428 = vld [vmem:[#allocation9 + $0x140] sm:$0xff]
        %v429 = vld [vmem:[#allocation9 + $0x148] sm:$0xff]
        %v430 = vld [vmem:[#allocation9 + $0x150] sm:$0xff]
        %v431 = vld [vmem:[#allocation9 + $0x158] sm:$0xff]
        %v432 = vld [vmem:[#allocation9 + $0x160] sm:$0xff]
        %v433 = vld [vmem:[#allocation9 + $0x168] sm:$0xff]
        %v434 = vld [vmem:[#allocation9 + $0x170] sm:$0xff]
        %v435 = vld [vmem:[#allocation9 + $0x178] sm:$0xff]
        %v436 = vld [vmem:[#allocation9 + $0x180] sm:$0xff]
        %v437 = vld [vmem:[#allocation9 + $0x188] sm:$0xff]
        %v438 = vld [vmem:[#allocation9 + $0x190] sm:$0xff]
        %v439 = vld [vmem:[#allocation9 + $0x198] sm:$0xff]
        %v440 = vld [vmem:[#allocation9 + $0x1a0] sm:$0xff]
        %v441 = vld [vmem:[#allocation9 + $0x1a8] sm:$0xff]
        %v442 = vld [vmem:[#allocation9 + $0x1b0] sm:$0xff]
        %v443 = vld [vmem:[#allocation9 + $0x1b8] sm:$0xff]
        %v444 = vld [vmem:[#allocation9 + $0x1c0] sm:$0xff]
        %v445 = vld [vmem:[#allocation9 + $0x1c8] sm:$0xff]
        %v446 = vld [vmem:[#allocation9 + $0x1d0] sm:$0xff]
        %v447 = vld [vmem:[#allocation9 + $0x1d8] sm:$0xff]
        %v448 = vld [vmem:[#allocation9 + $0x1e0] sm:$0xff]
        %v449 = vld [vmem:[#allocation9 + $0x1e8] sm:$0xff]
        %v450 = vld [vmem:[#allocation9 + $0x1f0] sm:$0xff]
        %v451 = vld [vmem:[#allocation9 + $0x1f8] sm:$0xff]
        %v452 = vld [vmem:[%s2] sm:$0x3]
        %v454 = vlaneseq
        %v455 = vshrl.u32 %v454, 7
        %v456 = vsub.s32 0, %v455
        %v457 = vrot.slane %v452, %v456
        %v458 = vlaneseq
        %v459 = vshrl.u32 %v458, 7
        %v460 = vsub.s32 1, %v459
        %v461 = vrot.slane %v452, %v460
        %v496 = vunpack.c.l.b16 %v356
        %v497 = vunpack.c.h.b16 %v356
        %v498 = vunpack.c.l.b16 %v357
        %v499 = vunpack.c.h.b16 %v357
        %v500 = vunpack.c.l.b16 %v358
        %v501 = vunpack.c.h.b16 %v358
        %v502 = vunpack.c.l.b16 %v359
        %v503 = vunpack.c.h.b16 %v359
        %v504 = vunpack.c.l.b16 %v360
        %v505 = vunpack.c.h.b16 %v360
        %v506 = vunpack.c.l.b16 %v361
        %v507 = vunpack.c.h.b16 %v361
        %v508 = vunpack.c.l.b16 %v362
        %v509 = vunpack.c.h.b16 %v362
        %v510 = vunpack.c.l.b16 %v363
        %v511 = vunpack.c.h.b16 %v363
        %v512 = vunpack.c.l.b16 %v364
        %v513 = vunpack.c.h.b16 %v364
        %v514 = vunpack.c.l.b16 %v365
        %v515 = vunpack.c.h.b16 %v365
        %v516 = vunpack.c.l.b16 %v366
        %v517 = vunpack.c.h.b16 %v366
        %v518 = vunpack.c.l.b16 %v367
        %v519 = vunpack.c.h.b16 %v367
        %v520 = vunpack.c.l.b16 %v368
        %v521 = vunpack.c.h.b16 %v368
        %v522 = vunpack.c.l.b16 %v369
        %v523 = vunpack.c.h.b16 %v369
        %v524 = vunpack.c.l.b16 %v370
        %v525 = vunpack.c.h.b16 %v370
        %v526 = vunpack.c.l.b16 %v371
        %v527 = vunpack.c.h.b16 %v371
        %v528 = vunpack.c.l.b16 %v372
        %v529 = vunpack.c.h.b16 %v372
        %v530 = vunpack.c.l.b16 %v373
        %v531 = vunpack.c.h.b16 %v373
        %v532 = vunpack.c.l.b16 %v374
        %v533 = vunpack.c.h.b16 %v374
        %v534 = vunpack.c.l.b16 %v375
        %v535 = vunpack.c.h.b16 %v375
        %v536 = vunpack.c.l.b16 %v376
        %v537 = vunpack.c.h.b16 %v376
        %v538 = vunpack.c.l.b16 %v377
        %v539 = vunpack.c.h.b16 %v377
        %v540 = vunpack.c.l.b16 %v378
        %v541 = vunpack.c.h.b16 %v378
        %v542 = vunpack.c.l.b16 %v379
        %v543 = vunpack.c.h.b16 %v379
        %v544 = vunpack.c.l.b16 %v380
        %v545 = vunpack.c.h.b16 %v380
        %v546 = vunpack.c.l.b16 %v381
        %v547 = vunpack.c.h.b16 %v381
        %v548 = vunpack.c.l.b16 %v382
        %v549 = vunpack.c.h.b16 %v382
        %v550 = vunpack.c.l.b16 %v383
        %v551 = vunpack.c.h.b16 %v383
        %v552 = vunpack.c.l.b16 %v384
        %v553 = vunpack.c.h.b16 %v384
        %v554 = vunpack.c.l.b16 %v385
        %v555 = vunpack.c.h.b16 %v385
        %v556 = vunpack.c.l.b16 %v386
        %v557 = vunpack.c.h.b16 %v386
        %v558 = vunpack.c.l.b16 %v387
        %v559 = vunpack.c.h.b16 %v387
        %v560 = vpack.c.b16 %v500, %v496
        %v561 = vpack.c.b16 %v501, %v497
        %v562 = vpack.c.b16 %v502, %v498
        %v563 = vpack.c.b16 %v503, %v499
        %v564 = vpack.c.b16 %v508, %v504
        %v565 = vpack.c.b16 %v509, %v505
        %v566 = vpack.c.b16 %v510, %v506
        %v567 = vpack.c.b16 %v511, %v507
        %v568 = vpack.c.b16 %v516, %v512
        %v569 = vpack.c.b16 %v517, %v513
        %v570 = vpack.c.b16 %v518, %v514
        %v571 = vpack.c.b16 %v519, %v515
        %v572 = vpack.c.b16 %v524, %v520
        %v573 = vpack.c.b16 %v525, %v521
        %v574 = vpack.c.b16 %v526, %v522
        %v575 = vpack.c.b16 %v527, %v523
        %v576 = vpack.c.b16 %v532, %v528
        %v577 = vpack.c.b16 %v533, %v529
        %v578 = vpack.c.b16 %v534, %v530
        %v579 = vpack.c.b16 %v535, %v531
        %v580 = vpack.c.b16 %v540, %v536
        %v581 = vpack.c.b16 %v541, %v537
        %v582 = vpack.c.b16 %v542, %v538
        %v583 = vpack.c.b16 %v543, %v539
        %v584 = vpack.c.b16 %v548, %v544
        %v585 = vpack.c.b16 %v549, %v545
        %v586 = vpack.c.b16 %v550, %v546
        %v587 = vpack.c.b16 %v551, %v547
        %v588 = vpack.c.b16 %v556, %v552
        %v589 = vpack.c.b16 %v557, %v553
        %v590 = vpack.c.b16 %v558, %v554
        %v591 = vpack.c.b16 %v559, %v555
        %v688 = vunpack.c.l.b16 %v388
        %v689 = vunpack.c.h.b16 %v388
        %v690 = vunpack.c.l.b16 %v389
        %v691 = vunpack.c.h.b16 %v389
        %v692 = vunpack.c.l.b16 %v390
        %v693 = vunpack.c.h.b16 %v390
        %v694 = vunpack.c.l.b16 %v391
        %v695 = vunpack.c.h.b16 %v391
        %v696 = vunpack.c.l.b16 %v392
        %v697 = vunpack.c.h.b16 %v392
        %v698 = vunpack.c.l.b16 %v393
        %v699 = vunpack.c.h.b16 %v393
        %v700 = vunpack.c.l.b16 %v394
        %v701 = vunpack.c.h.b16 %v394
        %v702 = vunpack.c.l.b16 %v395
        %v703 = vunpack.c.h.b16 %v395
        %v704 = vunpack.c.l.b16 %v396
        %v705 = vunpack.c.h.b16 %v396
        %v706 = vunpack.c.l.b16 %v397
        %v707 = vunpack.c.h.b16 %v397
        %v708 = vunpack.c.l.b16 %v398
        %v709 = vunpack.c.h.b16 %v398
        %v710 = vunpack.c.l.b16 %v399
        %v711 = vunpack.c.h.b16 %v399
        %v712 = vunpack.c.l.b16 %v400
        %v713 = vunpack.c.h.b16 %v400
        %v714 = vunpack.c.l.b16 %v401
        %v715 = vunpack.c.h.b16 %v401
        %v716 = vunpack.c.l.b16 %v402
        %v717 = vunpack.c.h.b16 %v402
        %v718 = vunpack.c.l.b16 %v403
        %v719 = vunpack.c.h.b16 %v403
        %v720 = vunpack.c.l.b16 %v404
        %v721 = vunpack.c.h.b16 %v404
        %v722 = vunpack.c.l.b16 %v405
        %v723 = vunpack.c.h.b16 %v405
        %v724 = vunpack.c.l.b16 %v406
        %v725 = vunpack.c.h.b16 %v406
        %v726 = vunpack.c.l.b16 %v407
        %v727 = vunpack.c.h.b16 %v407
        %v728 = vunpack.c.l.b16 %v408
        %v729 = vunpack.c.h.b16 %v408
        %v730 = vunpack.c.l.b16 %v409
        %v731 = vunpack.c.h.b16 %v409
        %v732 = vunpack.c.l.b16 %v410
        %v733 = vunpack.c.h.b16 %v410
        %v734 = vunpack.c.l.b16 %v411
        %v735 = vunpack.c.h.b16 %v411
        %v736 = vunpack.c.l.b16 %v412
        %v737 = vunpack.c.h.b16 %v412
        %v738 = vunpack.c.l.b16 %v413
        %v739 = vunpack.c.h.b16 %v413
        %v740 = vunpack.c.l.b16 %v414
        %v741 = vunpack.c.h.b16 %v414
        %v742 = vunpack.c.l.b16 %v415
        %v743 = vunpack.c.h.b16 %v415
        %v744 = vunpack.c.l.b16 %v416
        %v745 = vunpack.c.h.b16 %v416
        %v746 = vunpack.c.l.b16 %v417
        %v747 = vunpack.c.h.b16 %v417
        %v748 = vunpack.c.l.b16 %v418
        %v749 = vunpack.c.h.b16 %v418
        %v750 = vunpack.c.l.b16 %v419
        %v751 = vunpack.c.h.b16 %v419
        %v752 = vunpack.c.l.b16 %v420
        %v753 = vunpack.c.h.b16 %v420
        %v754 = vunpack.c.l.b16 %v421
        %v755 = vunpack.c.h.b16 %v421
        %v756 = vunpack.c.l.b16 %v422
        %v757 = vunpack.c.h.b16 %v422
        %v758 = vunpack.c.l.b16 %v423
        %v759 = vunpack.c.h.b16 %v423
        %v760 = vunpack.c.l.b16 %v424
        %v761 = vunpack.c.h.b16 %v424
        %v762 = vunpack.c.l.b16 %v425
        %v763 = vunpack.c.h.b16 %v425
        %v764 = vunpack.c.l.b16 %v426
        %v765 = vunpack.c.h.b16 %v426
        %v766 = vunpack.c.l.b16 %v427
        %v767 = vunpack.c.h.b16 %v427
        %v768 = vunpack.c.l.b16 %v428
        %v769 = vunpack.c.h.b16 %v428
        %v770 = vunpack.c.l.b16 %v429
        %v771 = vunpack.c.h.b16 %v429
        %v772 = vunpack.c.l.b16 %v430
        %v773 = vunpack.c.h.b16 %v430
        %v774 = vunpack.c.l.b16 %v431
        %v775 = vunpack.c.h.b16 %v431
        %v776 = vunpack.c.l.b16 %v432
        %v777 = vunpack.c.h.b16 %v432
        %v778 = vunpack.c.l.b16 %v433
        %v779 = vunpack.c.h.b16 %v433
        %v780 = vunpack.c.l.b16 %v434
        %v781 = vunpack.c.h.b16 %v434
        %v782 = vunpack.c.l.b16 %v435
        %v783 = vunpack.c.h.b16 %v435
        %v784 = vunpack.c.l.b16 %v436
        %v785 = vunpack.c.h.b16 %v436
        %v786 = vunpack.c.l.b16 %v437
        %v787 = vunpack.c.h.b16 %v437
        %v788 = vunpack.c.l.b16 %v438
        %v789 = vunpack.c.h.b16 %v438
        %v790 = vunpack.c.l.b16 %v439
        %v791 = vunpack.c.h.b16 %v439
        %v792 = vunpack.c.l.b16 %v440
        %v793 = vunpack.c.h.b16 %v440
        %v794 = vunpack.c.l.b16 %v441
        %v795 = vunpack.c.h.b16 %v441
        %v796 = vunpack.c.l.b16 %v442
        %v797 = vunpack.c.h.b16 %v442
        %v798 = vunpack.c.l.b16 %v443
        %v799 = vunpack.c.h.b16 %v443
        %v800 = vunpack.c.l.b16 %v444
        %v801 = vunpack.c.h.b16 %v444
        %v802 = vunpack.c.l.b16 %v445
        %v803 = vunpack.c.h.b16 %v445
        %v804 = vunpack.c.l.b16 %v446
        %v805 = vunpack.c.h.b16 %v446
        %v806 = vunpack.c.l.b16 %v447
        %v807 = vunpack.c.h.b16 %v447
        %v808 = vunpack.c.l.b16 %v448
        %v809 = vunpack.c.h.b16 %v448
        %v810 = vunpack.c.l.b16 %v449
        %v811 = vunpack.c.h.b16 %v449
        %v812 = vunpack.c.l.b16 %v450
        %v813 = vunpack.c.h.b16 %v450
        %v814 = vunpack.c.l.b16 %v451
        %v815 = vunpack.c.h.b16 %v451
        %v816 = vpack.c.b16 %v690, %v688
        %v817 = vpack.c.b16 %v691, %v689
        %v818 = vpack.c.b16 %v694, %v692
        %v819 = vpack.c.b16 %v695, %v693
        %v820 = vpack.c.b16 %v698, %v696
        %v821 = vpack.c.b16 %v699, %v697
        %v822 = vpack.c.b16 %v702, %v700
        %v823 = vpack.c.b16 %v703, %v701
        %v824 = vpack.c.b16 %v706, %v704
        %v825 = vpack.c.b16 %v707, %v705
        %v826 = vpack.c.b16 %v710, %v708
        %v827 = vpack.c.b16 %v711, %v709
        %v828 = vpack.c.b16 %v714, %v712
        %v829 = vpack.c.b16 %v715, %v713
        %v830 = vpack.c.b16 %v718, %v716
        %v831 = vpack.c.b16 %v719, %v717
        %v832 = vpack.c.b16 %v722, %v720
        %v833 = vpack.c.b16 %v723, %v721
        %v834 = vpack.c.b16 %v726, %v724
        %v835 = vpack.c.b16 %v727, %v725
        %v836 = vpack.c.b16 %v730, %v728
        %v837 = vpack.c.b16 %v731, %v729
        %v838 = vpack.c.b16 %v734, %v732
        %v839 = vpack.c.b16 %v735, %v733
        %v840 = vpack.c.b16 %v738, %v736
        %v841 = vpack.c.b16 %v739, %v737
        %v842 = vpack.c.b16 %v742, %v740
        %v843 = vpack.c.b16 %v743, %v741
        %v844 = vpack.c.b16 %v746, %v744
        %v845 = vpack.c.b16 %v747, %v745
        %v846 = vpack.c.b16 %v750, %v748
        %v847 = vpack.c.b16 %v751, %v749
        %v848 = vpack.c.b16 %v754, %v752
        %v849 = vpack.c.b16 %v755, %v753
        %v850 = vpack.c.b16 %v758, %v756
        %v851 = vpack.c.b16 %v759, %v757
        %v852 = vpack.c.b16 %v762, %v760
        %v853 = vpack.c.b16 %v763, %v761
        %v854 = vpack.c.b16 %v766, %v764
        %v855 = vpack.c.b16 %v767, %v765
        %v856 = vpack.c.b16 %v770, %v768
        %v857 = vpack.c.b16 %v771, %v769
        %v858 = vpack.c.b16 %v774, %v772
        %v859 = vpack.c.b16 %v775, %v773
        %v860 = vpack.c.b16 %v778, %v776
        %v861 = vpack.c.b16 %v779, %v777
        %v862 = vpack.c.b16 %v782, %v780
        %v863 = vpack.c.b16 %v783, %v781
        %v864 = vpack.c.b16 %v786, %v784
        %v865 = vpack.c.b16 %v787, %v785
        %v866 = vpack.c.b16 %v790, %v788
        %v867 = vpack.c.b16 %v791, %v789
        %v868 = vpack.c.b16 %v794, %v792
        %v869 = vpack.c.b16 %v795, %v793
        %v870 = vpack.c.b16 %v798, %v796
        %v871 = vpack.c.b16 %v799, %v797
        %v872 = vpack.c.b16 %v802, %v800
        %v873 = vpack.c.b16 %v803, %v801
        %v874 = vpack.c.b16 %v806, %v804
        %v875 = vpack.c.b16 %v807, %v805
        %v876 = vpack.c.b16 %v810, %v808
        %v877 = vpack.c.b16 %v811, %v809
        %v878 = vpack.c.b16 %v814, %v812
        %v879 = vpack.c.b16 %v815, %v813
        %944 = vmatprep.subr.bf16.mxu0 %v817
        %945 = vmatpush1.bf16.msra.mxu0 %v816
        %946 = vmatprep.subr.bf16.mxu0 %v819
        %947 = vmatpush1.bf16.msra.mxu0 %v818
        %948 = vmatprep.subr.bf16.mxu0 %v821
        %949 = vmatpush1.bf16.msra.mxu0 %v820
        %950 = vmatprep.subr.bf16.mxu0 %v823
        %951 = vmatpush1.bf16.msra.mxu0 %v822
        %952 = vmatprep.subr.bf16.mxu0 %v825
        %953 = vmatpush1.bf16.msra.mxu0 %v824
        %954 = vmatprep.subr.bf16.mxu0 %v827
        %955 = vmatpush1.bf16.msra.mxu0 %v826
        %956 = vmatprep.subr.bf16.mxu0 %v829
        %957 = vmatpush1.bf16.msra.mxu0 %v828
        %958 = vmatprep.subr.bf16.mxu0 %v831
        %959 = vmatpush1.bf16.msra.mxu0 %v830
        %960 = vmatprep.subr.bf16.mxu0 %v833
        %961 = vmatpush1.bf16.msra.mxu0 %v832
        %962 = vmatprep.subr.bf16.mxu0 %v835
        %963 = vmatpush1.bf16.msra.mxu0 %v834
        %964 = vmatprep.subr.bf16.mxu0 %v837
        %965 = vmatpush1.bf16.msra.mxu0 %v836
        %966 = vmatprep.subr.bf16.mxu0 %v839
        %967 = vmatpush1.bf16.msra.mxu0 %v838
        %968 = vmatprep.subr.bf16.mxu0 %v841
        %969 = vmatpush1.bf16.msra.mxu0 %v840
        %970 = vmatprep.subr.bf16.mxu0 %v843
        %971 = vmatpush1.bf16.msra.mxu0 %v842
        %972 = vmatprep.subr.bf16.mxu0 %v845
        %973 = vmatpush1.bf16.msra.mxu0 %v844
        %974 = vmatprep.subr.bf16.mxu0 %v847
        %975 = vmatpush1.bf16.msra.mxu0 %v846
        %976 = vmatprep.mubr.bf16.mxu0 %v561
        %977 = vmatmul.mubr.bf16.gmra.mrb[0].mxu0 %v560
        %v978 = vpop.f32.mrb[0].mxu0
        %v979 = vadd.f32 %v457, %v978
        %v980 = vpop.f32.mrb[0].mxu0
        %v981 = vadd.f32 %v461, %v980
        %v982 = vpop.f32.mrb[0].mxu0
        %v983 = vadd.f32 %v457, %v982
        %v984 = vpop.f32.mrb[0].mxu0
        %v985 = vadd.f32 %v461, %v984
        %986 = vmatprep.mubr.bf16.mxu0 %v565
        %987 = vmatmul.mubr.bf16.gmra.mrb[0].mxu0 %v564
        %v988 = vpop.f32.mrb[0].mxu0
        %v989 = vadd.f32 %v457, %v988
        %v990 = vpop.f32.mrb[0].mxu0
        %v991 = vadd.f32 %v461, %v990
        %v992 = vpop.f32.mrb[0].mxu0
        %v993 = vadd.f32 %v457, %v992
        %v994 = vpop.f32.mrb[0].mxu0
        %v995 = vadd.f32 %v461, %v994
        %996 = vmatprep.mubr.bf16.mxu0 %v569
        %997 = vmatmul.mubr.bf16.gmra.mrb[0].mxu0 %v568
        %v998 = vpop.f32.mrb[0].mxu0
        %v999 = vadd.f32 %v457, %v998
        %v1000 = vpop.f32.mrb[0].mxu0
        %v1001 = vadd.f32 %v461, %v1000
        %v1002 = vpop.f32.mrb[0].mxu0
        %v1003 = vadd.f32 %v457, %v1002
        %v1004 = vpop.f32.mrb[0].mxu0
        %v1005 = vadd.f32 %v461, %v1004
        %1006 = vmatprep.mubr.bf16.mxu0 %v573
        %1007 = vmatmul.mubr.bf16.gmra.mrb[0].mxu0 %v572
        %v1008 = vpop.f32.mrb[0].mxu0
        %v1009 = vadd.f32 %v457, %v1008
        %v1010 = vpop.f32.mrb[0].mxu0
        %v1011 = vadd.f32 %v461, %v1010
        %v1012 = vpop.f32.mrb[0].mxu0
        %v1013 = vadd.f32 %v457, %v1012
        %v1014 = vpop.f32.mrb[0].mxu0
        %v1015 = vadd.f32 %v461, %v1014
        %1016 = vmatprep.mubr.bf16.mxu0 %v577
        %1017 = vmatmul.mubr.bf16.gmra.mrb[0].mxu0 %v576
        %v1018 = vpop.f32.mrb[0].mxu0
        %v1019 = vadd.f32 %v457, %v1018
        %v1020 = vpop.f32.mrb[0].mxu0
        %v1021 = vadd.f32 %v461, %v1020
        %v1022 = vpop.f32.mrb[0].mxu0
        %v1023 = vadd.f32 %v457, %v1022
        %v1024 = vpop.f32.mrb[0].mxu0
        %v1025 = vadd.f32 %v461, %v1024
        %1026 = vmatprep.mubr.bf16.mxu0 %v581
        %1027 = vmatmul.mubr.bf16.gmra.mrb[0].mxu0 %v580
        %v1028 = vpop.f32.mrb[0].mxu0
        %v1029 = vadd.f32 %v457, %v1028
        %v1030 = vpop.f32.mrb[0].mxu0
        %v1031 = vadd.f32 %v461, %v1030
        %v1032 = vpop.f32.mrb[0].mxu0
        %v1033 = vadd.f32 %v457, %v1032
        %v1034 = vpop.f32.mrb[0].mxu0
        %v1035 = vadd.f32 %v461, %v1034
        %1036 = vmatprep.mubr.bf16.mxu0 %v585
        %1037 = vmatmul.mubr.bf16.gmra.mrb[0].mxu0 %v584
        %v1038 = vpop.f32.mrb[0].mxu0
        %v1039 = vadd.f32 %v457, %v1038
        %v1040 = vpop.f32.mrb[0].mxu0
        %v1041 = vadd.f32 %v461, %v1040
        %v1042 = vpop.f32.mrb[0].mxu0
        %v1043 = vadd.f32 %v457, %v1042
        %v1044 = vpop.f32.mrb[0].mxu0
        %v1045 = vadd.f32 %v461, %v1044
        %1046 = vmatprep.mubr.bf16.mxu0 %v589
        %1047 = vmatmul.mubr.bf16.gmra.mrb[0].mxu0 %v588
        %v1048 = vpop.f32.mrb[0].mxu0
        %v1049 = vadd.f32 %v457, %v1048
        %v1050 = vpop.f32.mrb[0].mxu0
        %v1051 = vadd.f32 %v461, %v1050
        %v1052 = vpop.f32.mrb[0].mxu0
        %v1053 = vadd.f32 %v457, %v1052
        %v1054 = vpop.f32.mrb[0].mxu0
        %v1055 = vadd.f32 %v461, %v1054
        %1056 = vdwg.mxu0
        %1057 = vmatprep.subr.bf16.mxu0 %v849
        %1058 = vmatpush1.bf16.msra.mxu0 %v848
        %1059 = vmatprep.subr.bf16.mxu0 %v851
        %1060 = vmatpush1.bf16.msra.mxu0 %v850
        %1061 = vmatprep.subr.bf16.mxu0 %v853
        %1062 = vmatpush1.bf16.msra.mxu0 %v852
        %1063 = vmatprep.subr.bf16.mxu0 %v855
        %1064 = vmatpush1.bf16.msra.mxu0 %v854
        %1065 = vmatprep.subr.bf16.mxu0 %v857
        %1066 = vmatpush1.bf16.msra.mxu0 %v856
        %1067 = vmatprep.subr.bf16.mxu0 %v859
        %1068 = vmatpush1.bf16.msra.mxu0 %v858
        %1069 = vmatprep.subr.bf16.mxu0 %v861
        %1070 = vmatpush1.bf16.msra.mxu0 %v860
        %1071 = vmatprep.subr.bf16.mxu0 %v863
        %1072 = vmatpush1.bf16.msra.mxu0 %v862
        %1073 = vmatprep.subr.bf16.mxu0 %v865
        %1074 = vmatpush1.bf16.msra.mxu0 %v864
        %1075 = vmatprep.subr.bf16.mxu0 %v867
        %1076 = vmatpush1.bf16.msra.mxu0 %v866
        %1077 = vmatprep.subr.bf16.mxu0 %v869
        %1078 = vmatpush1.bf16.msra.mxu0 %v868
        %1079 = vmatprep.subr.bf16.mxu0 %v871
        %1080 = vmatpush1.bf16.msra.mxu0 %v870
        %1081 = vmatprep.subr.bf16.mxu0 %v873
        %1082 = vmatpush1.bf16.msra.mxu0 %v872
        %1083 = vmatprep.subr.bf16.mxu0 %v875
        %1084 = vmatpush1.bf16.msra.mxu0 %v874
        %1085 = vmatprep.subr.bf16.mxu0 %v877
        %1086 = vmatpush1.bf16.msra.mxu0 %v876
        %1087 = vmatprep.subr.bf16.mxu0 %v879
        %1088 = vmatpush1.bf16.msra.mxu0 %v878
        %1089 = vmatprep.mubr.bf16.mxu0 %v563
        %1090 = vmatmul.mubr.bf16.gmra.mrb[0].mxu0 %v562
        %v1091 = vpop.f32.mrb[0].mxu0
        %v1092 = vadd.f32 %v979, %v1091
        %v1093 = vpop.f32.mrb[0].mxu0
        %v1094 = vadd.f32 %v981, %v1093
        %v1095 = vpop.f32.mrb[0].mxu0
        %v1096 = vadd.f32 %v983, %v1095
        %v1097 = vpop.f32.mrb[0].mxu0
        %v1098 = vadd.f32 %v985, %v1097
        %1099 = vmatprep.mubr.bf16.mxu0 %v567
        %1100 = vmatmul.mubr.bf16.gmra.mrb[0].mxu0 %v566
        %v1101 = vpop.f32.mrb[0].mxu0
        %v1102 = vadd.f32 %v989, %v1101
        %v1103 = vpop.f32.mrb[0].mxu0
        %v1104 = vadd.f32 %v991, %v1103
        %v1105 = vpop.f32.mrb[0].mxu0
        %v1106 = vadd.f32 %v993, %v1105
        %v1107 = vpop.f32.mrb[0].mxu0
        %v1108 = vadd.f32 %v995, %v1107
        %1109 = vmatprep.mubr.bf16.mxu0 %v571
        %1110 = vmatmul.mubr.bf16.gmra.mrb[0].mxu0 %v570
        %v1111 = vpop.f32.mrb[0].mxu0
        %v1112 = vadd.f32 %v999, %v1111
        %v1113 = vpop.f32.mrb[0].mxu0
        %v1114 = vadd.f32 %v1001, %v1113
        %v1115 = vpop.f32.mrb[0].mxu0
        %v1116 = vadd.f32 %v1003, %v1115
        %v1117 = vpop.f32.mrb[0].mxu0
        %v1118 = vadd.f32 %v1005, %v1117
        %1119 = vmatprep.mubr.bf16.mxu0 %v575
        %1120 = vmatmul.mubr.bf16.gmra.mrb[0].mxu0 %v574
        %v1121 = vpop.f32.mrb[0].mxu0
        %v1122 = vadd.f32 %v1009, %v1121
        %v1123 = vpop.f32.mrb[0].mxu0
        %v1124 = vadd.f32 %v1011, %v1123
        %v1125 = vpop.f32.mrb[0].mxu0
        %v1126 = vadd.f32 %v1013, %v1125
        %v1127 = vpop.f32.mrb[0].mxu0
        %v1128 = vadd.f32 %v1015, %v1127
        %1129 = vmatprep.mubr.bf16.mxu0 %v579
        %1130 = vmatmul.mubr.bf16.gmra.mrb[0].mxu0 %v578
        %v1131 = vpop.f32.mrb[0].mxu0
        %v1132 = vadd.f32 %v1019, %v1131
        %v1133 = vpop.f32.mrb[0].mxu0
        %v1134 = vadd.f32 %v1021, %v1133
        %v1135 = vpop.f32.mrb[0].mxu0
        %v1136 = vadd.f32 %v1023, %v1135
        %v1137 = vpop.f32.mrb[0].mxu0
        %v1138 = vadd.f32 %v1025, %v1137
        %1139 = vmatprep.mubr.bf16.mxu0 %v583
        %1140 = vmatmul.mubr.bf16.gmra.mrb[0].mxu0 %v582
        %v1141 = vpop.f32.mrb[0].mxu0
        %v1142 = vadd.f32 %v1029, %v1141
        %v1143 = vpop.f32.mrb[0].mxu0
        %v1144 = vadd.f32 %v1031, %v1143
        %v1145 = vpop.f32.mrb[0].mxu0
        %v1146 = vadd.f32 %v1033, %v1145
        %v1147 = vpop.f32.mrb[0].mxu0
        %v1148 = vadd.f32 %v1035, %v1147
        %1149 = vmatprep.mubr.bf16.mxu0 %v587
        %1150 = vmatmul.mubr.bf16.gmra.mrb[0].mxu0 %v586
        %v1151 = vpop.f32.mrb[0].mxu0
        %v1152 = vadd.f32 %v1039, %v1151
        %v1153 = vpop.f32.mrb[0].mxu0
        %v1154 = vadd.f32 %v1041, %v1153
        %v1155 = vpop.f32.mrb[0].mxu0
        %v1156 = vadd.f32 %v1043, %v1155
        %v1157 = vpop.f32.mrb[0].mxu0
        %v1158 = vadd.f32 %v1045, %v1157
        %1159 = vmatprep.mubr.bf16.mxu0 %v591
        %1160 = vmatmul.mubr.bf16.gmra.mrb[0].mxu0 %v590
        %v1161 = vpop.f32.mrb[0].mxu0
        %v1162 = vadd.f32 %v1049, %v1161
        %v1163 = vpop.f32.mrb[0].mxu0
        %v1164 = vadd.f32 %v1051, %v1163
        %v1165 = vpop.f32.mrb[0].mxu0
        %v1166 = vadd.f32 %v1053, %v1165
        %v1167 = vpop.f32.mrb[0].mxu0
        %v1168 = vadd.f32 %v1055, %v1167
        %1169 = vdwg.mxu0
        %v1170 = vmax.f32 %v1092, 0.0
        %v1171 = vmax.f32 %v1094, 0.0
        %v1172 = vmax.f32 %v1096, 0.0
        %v1173 = vmax.f32 %v1098, 0.0
        %v1174 = vmax.f32 %v1102, 0.0
        %v1175 = vmax.f32 %v1104, 0.0
        %v1176 = vmax.f32 %v1106, 0.0
        %v1177 = vmax.f32 %v1108, 0.0
        %v1178 = vmax.f32 %v1112, 0.0
        %v1179 = vmax.f32 %v1114, 0.0
        %v1180 = vmax.f32 %v1116, 0.0
        %v1181 = vmax.f32 %v1118, 0.0
        %v1182 = vmax.f32 %v1122, 0.0
        %v1183 = vmax.f32 %v1124, 0.0
        %v1184 = vmax.f32 %v1126, 0.0
        %v1185 = vmax.f32 %v1128, 0.0
        %v1186 = vmax.f32 %v1132, 0.0
        %v1187 = vmax.f32 %v1134, 0.0
        %v1188 = vmax.f32 %v1136, 0.0
        %v1189 = vmax.f32 %v1138, 0.0
        %v1190 = vmax.f32 %v1142, 0.0
        %v1191 = vmax.f32 %v1144, 0.0
        %v1192 = vmax.f32 %v1146, 0.0
        %v1193 = vmax.f32 %v1148, 0.0
        %v1194 = vmax.f32 %v1152, 0.0
        %v1195 = vmax.f32 %v1154, 0.0
        %v1196 = vmax.f32 %v1156, 0.0
        %v1197 = vmax.f32 %v1158, 0.0
        %v1198 = vmax.f32 %v1162, 0.0
        %v1199 = vmax.f32 %v1164, 0.0
        %v1200 = vmax.f32 %v1166, 0.0
        %v1201 = vmax.f32 %v1168, 0.0
        %v1202 = vpack.c.bf16 %v1172, %v1170
        %v1203 = vpack.c.bf16 %v1173, %v1171
        %v1204 = vpack.c.bf16 %v1176, %v1174
        %v1205 = vpack.c.bf16 %v1177, %v1175
        %v1206 = vpack.c.bf16 %v1180, %v1178
        %v1207 = vpack.c.bf16 %v1181, %v1179
        %v1208 = vpack.c.bf16 %v1184, %v1182
        %v1209 = vpack.c.bf16 %v1185, %v1183
        %v1210 = vpack.c.bf16 %v1188, %v1186
        %v1211 = vpack.c.bf16 %v1189, %v1187
        %v1212 = vpack.c.bf16 %v1192, %v1190
        %v1213 = vpack.c.bf16 %v1193, %v1191
        %v1214 = vpack.c.bf16 %v1196, %v1194
        %v1215 = vpack.c.bf16 %v1197, %v1195
        %v1216 = vpack.c.bf16 %v1200, %v1198
        %v1217 = vpack.c.bf16 %v1201, %v1199
        %v1218 = vld [vmem:[#allocation11] sm:$0xff]
        %v1219 = vld [vmem:[#allocation11 + $0x8] sm:$0xff]
        %v1220 = vld [vmem:[#allocation11 + $0x10] sm:$0xff]
        %v1221 = vld [vmem:[#allocation11 + $0x18] sm:$0xff]
        %v1222 = vld [vmem:[#allocation11 + $0x20] sm:$0xff]
        %v1223 = vld [vmem:[#allocation11 + $0x28] sm:$0xff]
        %v1224 = vld [vmem:[#allocation11 + $0x30] sm:$0xff]
        %v1225 = vld [vmem:[#allocation11 + $0x38] sm:$0xff]
        %v1226 = vld [vmem:[#allocation11 + $0x40] sm:$0xff]
        %v1227 = vld [vmem:[#allocation11 + $0x48] sm:$0xff]
        %v1228 = vld [vmem:[#allocation11 + $0x50] sm:$0xff]
        %v1229 = vld [vmem:[#allocation11 + $0x58] sm:$0xff]
        %v1230 = vld [vmem:[#allocation11 + $0x60] sm:$0xff]
        %v1231 = vld [vmem:[#allocation11 + $0x68] sm:$0xff]
        %v1232 = vld [vmem:[#allocation11 + $0x70] sm:$0xff]
        %v1233 = vld [vmem:[#allocation11 + $0x78] sm:$0xff]
        %v1234 = vld [vmem:[#allocation11 + $0x80] sm:$0xff]
        %v1235 = vld [vmem:[#allocation11 + $0x88] sm:$0xff]
        %v1236 = vld [vmem:[#allocation11 + $0x90] sm:$0xff]
        %v1237 = vld [vmem:[#allocation11 + $0x98] sm:$0xff]
        %v1238 = vld [vmem:[#allocation11 + $0xa0] sm:$0xff]
        %v1239 = vld [vmem:[#allocation11 + $0xa8] sm:$0xff]
        %v1240 = vld [vmem:[#allocation11 + $0xb0] sm:$0xff]
        %v1241 = vld [vmem:[#allocation11 + $0xb8] sm:$0xff]
        %v1242 = vld [vmem:[#allocation11 + $0xc0] sm:$0xff]
        %v1243 = vld [vmem:[#allocation11 + $0xc8] sm:$0xff]
        %v1244 = vld [vmem:[#allocation11 + $0xd0] sm:$0xff]
        %v1245 = vld [vmem:[#allocation11 + $0xd8] sm:$0xff]
        %v1246 = vld [vmem:[#allocation11 + $0xe0] sm:$0xff]
        %v1247 = vld [vmem:[#allocation11 + $0xe8] sm:$0xff]
        %v1248 = vld [vmem:[#allocation11 + $0xf0] sm:$0xff]
        %v1249 = vld [vmem:[#allocation11 + $0xf8] sm:$0xff]
        %v1250 = vld [vmem:[%s4] sm:$0x3]
        %v1252 = vlaneseq
        %v1253 = vshrl.u32 %v1252, 7
        %v1254 = vsub.s32 0, %v1253
        %v1255 = vrot.slane %v1250, %v1254
        %v1256 = vlaneseq
        %v1257 = vshrl.u32 %v1256, 7
        %v1258 = vsub.s32 1, %v1257
        %v1259 = vrot.slane %v1250, %v1258
        %v1294 = vunpack.c.l.b16 %v1218
        %v1295 = vunpack.c.h.b16 %v1218
        %v1296 = vunpack.c.l.b16 %v1219
        %v1297 = vunpack.c.h.b16 %v1219
        %v1298 = vunpack.c.l.b16 %v1220
        %v1299 = vunpack.c.h.b16 %v1220
        %v1300 = vunpack.c.l.b16 %v1221
        %v1301 = vunpack.c.h.b16 %v1221
        %v1302 = vunpack.c.l.b16 %v1222
        %v1303 = vunpack.c.h.b16 %v1222
        %v1304 = vunpack.c.l.b16 %v1223
        %v1305 = vunpack.c.h.b16 %v1223
        %v1306 = vunpack.c.l.b16 %v1224
        %v1307 = vunpack.c.h.b16 %v1224
        %v1308 = vunpack.c.l.b16 %v1225
        %v1309 = vunpack.c.h.b16 %v1225
        %v1310 = vunpack.c.l.b16 %v1226
        %v1311 = vunpack.c.h.b16 %v1226
        %v1312 = vunpack.c.l.b16 %v1227
        %v1313 = vunpack.c.h.b16 %v1227
        %v1314 = vunpack.c.l.b16 %v1228
        %v1315 = vunpack.c.h.b16 %v1228
        %v1316 = vunpack.c.l.b16 %v1229
        %v1317 = vunpack.c.h.b16 %v1229
        %v1318 = vunpack.c.l.b16 %v1230
        %v1319 = vunpack.c.h.b16 %v1230
        %v1320 = vunpack.c.l.b16 %v1231
        %v1321 = vunpack.c.h.b16 %v1231
        %v1322 = vunpack.c.l.b16 %v1232
        %v1323 = vunpack.c.h.b16 %v1232
        %v1324 = vunpack.c.l.b16 %v1233
        %v1325 = vunpack.c.h.b16 %v1233
        %v1326 = vunpack.c.l.b16 %v1234
        %v1327 = vunpack.c.h.b16 %v1234
        %v1328 = vunpack.c.l.b16 %v1235
        %v1329 = vunpack.c.h.b16 %v1235
        %v1330 = vunpack.c.l.b16 %v1236
        %v1331 = vunpack.c.h.b16 %v1236
        %v1332 = vunpack.c.l.b16 %v1237
        %v1333 = vunpack.c.h.b16 %v1237
        %v1334 = vunpack.c.l.b16 %v1238
        %v1335 = vunpack.c.h.b16 %v1238
        %v1336 = vunpack.c.l.b16 %v1239
        %v1337 = vunpack.c.h.b16 %v1239
        %v1338 = vunpack.c.l.b16 %v1240
        %v1339 = vunpack.c.h.b16 %v1240
        %v1340 = vunpack.c.l.b16 %v1241
        %v1341 = vunpack.c.h.b16 %v1241
        %v1342 = vunpack.c.l.b16 %v1242
        %v1343 = vunpack.c.h.b16 %v1242
        %v1344 = vunpack.c.l.b16 %v1243
        %v1345 = vunpack.c.h.b16 %v1243
        %v1346 = vunpack.c.l.b16 %v1244
        %v1347 = vunpack.c.h.b16 %v1244
        %v1348 = vunpack.c.l.b16 %v1245
        %v1349 = vunpack.c.h.b16 %v1245
        %v1350 = vunpack.c.l.b16 %v1246
        %v1351 = vunpack.c.h.b16 %v1246
        %v1352 = vunpack.c.l.b16 %v1247
        %v1353 = vunpack.c.h.b16 %v1247
        %v1354 = vunpack.c.l.b16 %v1248
        %v1355 = vunpack.c.h.b16 %v1248
        %v1356 = vunpack.c.l.b16 %v1249
        %v1357 = vunpack.c.h.b16 %v1249
        %v1358 = vpack.c.b16 %v1296, %v1294
        %v1359 = vpack.c.b16 %v1297, %v1295
        %v1360 = vpack.c.b16 %v1300, %v1298
        %v1361 = vpack.c.b16 %v1301, %v1299
        %v1362 = vpack.c.b16 %v1304, %v1302
        %v1363 = vpack.c.b16 %v1305, %v1303
        %v1364 = vpack.c.b16 %v1308, %v1306
        %v1365 = vpack.c.b16 %v1309, %v1307
        %v1366 = vpack.c.b16 %v1312, %v1310
        %v1367 = vpack.c.b16 %v1313, %v1311
        %v1368 = vpack.c.b16 %v1316, %v1314
        %v1369 = vpack.c.b16 %v1317, %v1315
        %v1370 = vpack.c.b16 %v1320, %v1318
        %v1371 = vpack.c.b16 %v1321, %v1319
        %v1372 = vpack.c.b16 %v1324, %v1322
        %v1373 = vpack.c.b16 %v1325, %v1323
        %v1374 = vpack.c.b16 %v1328, %v1326
        %v1375 = vpack.c.b16 %v1329, %v1327
        %v1376 = vpack.c.b16 %v1332, %v1330
        %v1377 = vpack.c.b16 %v1333, %v1331
        %v1378 = vpack.c.b16 %v1336, %v1334
        %v1379 = vpack.c.b16 %v1337, %v1335
        %v1380 = vpack.c.b16 %v1340, %v1338
        %v1381 = vpack.c.b16 %v1341, %v1339
        %v1382 = vpack.c.b16 %v1344, %v1342
        %v1383 = vpack.c.b16 %v1345, %v1343
        %v1384 = vpack.c.b16 %v1348, %v1346
        %v1385 = vpack.c.b16 %v1349, %v1347
        %v1386 = vpack.c.b16 %v1352, %v1350
        %v1387 = vpack.c.b16 %v1353, %v1351
        %v1388 = vpack.c.b16 %v1356, %v1354
        %v1389 = vpack.c.b16 %v1357, %v1355
        %1422 = vmatprep.subr.bf16.mxu0 %v1359
        %1423 = vmatpush1.bf16.msra.mxu0 %v1358
        %1424 = vmatprep.subr.bf16.mxu0 %v1361
        %1425 = vmatpush1.bf16.msra.mxu0 %v1360
        %1426 = vmatprep.subr.bf16.mxu0 %v1363
        %1427 = vmatpush1.bf16.msra.mxu0 %v1362
        %1428 = vmatprep.subr.bf16.mxu0 %v1365
        %1429 = vmatpush1.bf16.msra.mxu0 %v1364
        %1430 = vmatprep.subr.bf16.mxu0 %v1367
        %1431 = vmatpush1.bf16.msra.mxu0 %v1366
        %1432 = vmatprep.subr.bf16.mxu0 %v1369
        %1433 = vmatpush1.bf16.msra.mxu0 %v1368
        %1434 = vmatprep.subr.bf16.mxu0 %v1371
        %1435 = vmatpush1.bf16.msra.mxu0 %v1370
        %1436 = vmatprep.subr.bf16.mxu0 %v1373
        %1437 = vmatpush1.bf16.msra.mxu0 %v1372
        %1438 = vmatprep.subr.bf16.mxu0 %v1375
        %1439 = vmatpush1.bf16.msra.mxu0 %v1374
        %1440 = vmatprep.subr.bf16.mxu0 %v1377
        %1441 = vmatpush1.bf16.msra.mxu0 %v1376
        %1442 = vmatprep.subr.bf16.mxu0 %v1379
        %1443 = vmatpush1.bf16.msra.mxu0 %v1378
        %1444 = vmatprep.subr.bf16.mxu0 %v1381
        %1445 = vmatpush1.bf16.msra.mxu0 %v1380
        %1446 = vmatprep.subr.bf16.mxu0 %v1383
        %1447 = vmatpush1.bf16.msra.mxu0 %v1382
        %1448 = vmatprep.subr.bf16.mxu0 %v1385
        %1449 = vmatpush1.bf16.msra.mxu0 %v1384
        %1450 = vmatprep.subr.bf16.mxu0 %v1387
        %1451 = vmatpush1.bf16.msra.mxu0 %v1386
        %1452 = vmatprep.subr.bf16.mxu0 %v1389
        %1453 = vmatpush1.bf16.msra.mxu0 %v1388
        %1454 = vmatprep.mubr.bf16.mxu0 %v1203
        %1455 = vmatmul.mubr.bf16.gmra.mrb[0].mxu0 %v1202
        %v1456 = vpop.f32.mrb[0].mxu0
        %v1457 = vadd.f32 %v1255, %v1456
        %v1458 = vpop.f32.mrb[0].mxu0
        %v1459 = vadd.f32 %v1259, %v1458
        %v1460 = vpop.f32.mrb[0].mxu0
        %v1461 = vadd.f32 %v1255, %v1460
        %v1462 = vpop.f32.mrb[0].mxu0
        %v1463 = vadd.f32 %v1259, %v1462
        %1464 = vmatprep.mubr.bf16.mxu0 %v1205
        %1465 = vmatmul.mubr.bf16.gmra.mrb[0].mxu0 %v1204
        %v1466 = vpop.f32.mrb[0].mxu0
        %v1467 = vadd.f32 %v1255, %v1466
        %v1468 = vpop.f32.mrb[0].mxu0
        %v1469 = vadd.f32 %v1259, %v1468
        %v1470 = vpop.f32.mrb[0].mxu0
        %v1471 = vadd.f32 %v1255, %v1470
        %v1472 = vpop.f32.mrb[0].mxu0
        %v1473 = vadd.f32 %v1259, %v1472
        %1474 = vmatprep.mubr.bf16.mxu0 %v1207
        %1475 = vmatmul.mubr.bf16.gmra.mrb[0].mxu0 %v1206
        %v1476 = vpop.f32.mrb[0].mxu0
        %v1477 = vadd.f32 %v1255, %v1476
        %v1478 = vpop.f32.mrb[0].mxu0
        %v1479 = vadd.f32 %v1259, %v1478
        %v1480 = vpop.f32.mrb[0].mxu0
        %v1481 = vadd.f32 %v1255, %v1480
        %v1482 = vpop.f32.mrb[0].mxu0
        %v1483 = vadd.f32 %v1259, %v1482
        %1484 = vmatprep.mubr.bf16.mxu0 %v1209
        %1485 = vmatmul.mubr.bf16.gmra.mrb[0].mxu0 %v1208
        %v1486 = vpop.f32.mrb[0].mxu0
        %v1487 = vadd.f32 %v1255, %v1486
        %v1488 = vpop.f32.mrb[0].mxu0
        %v1489 = vadd.f32 %v1259, %v1488
        %v1490 = vpop.f32.mrb[0].mxu0
        %v1491 = vadd.f32 %v1255, %v1490
        %v1492 = vpop.f32.mrb[0].mxu0
        %v1493 = vadd.f32 %v1259, %v1492
        %1494 = vmatprep.mubr.bf16.mxu0 %v1211
        %1495 = vmatmul.mubr.bf16.gmra.mrb[0].mxu0 %v1210
        %v1496 = vpop.f32.mrb[0].mxu0
        %v1497 = vadd.f32 %v1255, %v1496
        %v1498 = vpop.f32.mrb[0].mxu0
        %v1499 = vadd.f32 %v1259, %v1498
        %v1500 = vpop.f32.mrb[0].mxu0
        %v1501 = vadd.f32 %v1255, %v1500
        %v1502 = vpop.f32.mrb[0].mxu0
        %v1503 = vadd.f32 %v1259, %v1502
        %1504 = vmatprep.mubr.bf16.mxu0 %v1213
        %1505 = vmatmul.mubr.bf16.gmra.mrb[0].mxu0 %v1212
        %v1506 = vpop.f32.mrb[0].mxu0
        %v1507 = vadd.f32 %v1255, %v1506
        %v1508 = vpop.f32.mrb[0].mxu0
        %v1509 = vadd.f32 %v1259, %v1508
        %v1510 = vpop.f32.mrb[0].mxu0
        %v1511 = vadd.f32 %v1255, %v1510
        %v1512 = vpop.f32.mrb[0].mxu0
        %v1513 = vadd.f32 %v1259, %v1512
        %1514 = vmatprep.mubr.bf16.mxu0 %v1215
        %1515 = vmatmul.mubr.bf16.gmra.mrb[0].mxu0 %v1214
        %v1516 = vpop.f32.mrb[0].mxu0
        %v1517 = vadd.f32 %v1255, %v1516
        %v1518 = vpop.f32.mrb[0].mxu0
        %v1519 = vadd.f32 %v1259, %v1518
        %v1520 = vpop.f32.mrb[0].mxu0
        %v1521 = vadd.f32 %v1255, %v1520
        %v1522 = vpop.f32.mrb[0].mxu0
        %v1523 = vadd.f32 %v1259, %v1522
        %1524 = vmatprep.mubr.bf16.mxu0 %v1217
        %1525 = vmatmul.mubr.bf16.gmra.mrb[0].mxu0 %v1216
        %v1526 = vpop.f32.mrb[0].mxu0
        %v1527 = vadd.f32 %v1255, %v1526
        %v1528 = vpop.f32.mrb[0].mxu0
        %v1529 = vadd.f32 %v1259, %v1528
        %v1530 = vpop.f32.mrb[0].mxu0
        %v1531 = vadd.f32 %v1255, %v1530
        %v1532 = vpop.f32.mrb[0].mxu0
        %v1533 = vadd.f32 %v1259, %v1532
        %1534 = vdwg.mxu0
        %v1535 = vtanh.pop %v1457
        %v1536 = vtanh.pop %v1459
        %v1537 = vtanh.pop %v1461
        %v1538 = vtanh.pop %v1463
        %v1539 = vtanh.pop %v1467
        %v1540 = vtanh.pop %v1469
        %v1541 = vtanh.pop %v1471
        %v1542 = vtanh.pop %v1473
        %v1543 = vtanh.pop %v1477
        %v1544 = vtanh.pop %v1479
        %v1545 = vtanh.pop %v1481
        %v1546 = vtanh.pop %v1483
        %v1547 = vtanh.pop %v1487
        %v1548 = vtanh.pop %v1489
        %v1549 = vtanh.pop %v1491
        %v1550 = vtanh.pop %v1493
        %v1551 = vtanh.pop %v1497
        %v1552 = vtanh.pop %v1499
        %v1553 = vtanh.pop %v1501
        %v1554 = vtanh.pop %v1503
        %v1555 = vtanh.pop %v1507
        %v1556 = vtanh.pop %v1509
        %v1557 = vtanh.pop %v1511
        %v1558 = vtanh.pop %v1513
        %v1559 = vtanh.pop %v1517
        %v1560 = vtanh.pop %v1519
        %v1561 = vtanh.pop %v1521
        %v1562 = vtanh.pop %v1523
        %v1563 = vtanh.pop %v1527
        %v1564 = vtanh.pop %v1529
        %v1565 = vtanh.pop %v1531
        %v1566 = vtanh.pop %v1533
        %v1567 = vld [vmem:[%s5] sm:$0x3]
        %v1568 = vpack.c.bf16 %v1537, %v1535
        %v1569 = vpack.c.bf16 %v1538, %v1536
        %v1570 = vpack.c.bf16 %v1541, %v1539
        %v1571 = vpack.c.bf16 %v1542, %v1540
        %v1572 = vpack.c.bf16 %v1545, %v1543
        %v1573 = vpack.c.bf16 %v1546, %v1544
        %v1574 = vpack.c.bf16 %v1549, %v1547
        %v1575 = vpack.c.bf16 %v1550, %v1548
        %v1576 = vpack.c.bf16 %v1553, %v1551
        %v1577 = vpack.c.bf16 %v1554, %v1552
        %v1578 = vpack.c.bf16 %v1557, %v1555
        %v1579 = vpack.c.bf16 %v1558, %v1556
        %v1580 = vpack.c.bf16 %v1561, %v1559
        %v1581 = vpack.c.bf16 %v1562, %v1560
        %v1582 = vpack.c.bf16 %v1565, %v1563
        %v1583 = vpack.c.bf16 %v1566, %v1564
        %s1584 = sld [smem:[#allocation5]]
        %v1585 = vstv %s1584
        %v1588 = vunpack.c.l.s4 1966171168
        %v1589 = vunpack.c.0.s8 %v1588
        %v1590 = vlaneseq
        %v1591 = vshrl.u32 %v1590, 7
        %v1592 = vsub.s32 %v1589, %v1591
        %v1593 = vrot.slane %v1567, %v1592
        %v1594 = vcombine.high %v1593, %v1593
        %v1596 = vunpack.c.l.s4 1966171168
        %v1597 = vunpack.c.0.s8 %v1596
        %v1598 = vlaneseq
        %v1599 = vshrl.u32 %v1598, 7
        %v1600 = vsub.s32 %v1597, %v1599
        %v1601 = vrot.slane %v1593, %v1600
        %v1603 = vunpack.c.l.s4 1966171168
        %v1604 = vunpack.c.0.s8 %v1603
        %v1605 = vlaneseq
        %v1606 = vshrl.u32 %v1605, 7
        %v1607 = vsub.s32 %v1604, %v1606
        %v1608 = vrot.slane %v1594, %v1607
        %1611 = vmatprep.subr.bf16.mxu0 %v1569
        %1612 = vmatpush1.bf16.xpose.msra.mxu0 %v1568
        %1613 = vmatprep.subr.bf16.mxu0 %v1571
        %1614 = vmatpush1.bf16.xpose.msra.mxu0 %v1570
        %1615 = vmatprep.subr.bf16.mxu0 %v1573
        %1616 = vmatpush1.bf16.xpose.msra.mxu0 %v1572
        %1617 = vmatprep.subr.bf16.mxu0 %v1575
        %1618 = vmatpush1.bf16.xpose.msra.mxu0 %v1574
        %1619 = vmatprep.subr.bf16.mxu0 %v1577
        %1620 = vmatpush1.bf16.xpose.msra.mxu0 %v1576
        %1621 = vmatprep.subr.bf16.mxu0 %v1579
        %1622 = vmatpush1.bf16.xpose.msra.mxu0 %v1578
        %1623 = vmatprep.subr.bf16.mxu0 %v1581
        %1624 = vmatpush1.bf16.xpose.msra.mxu0 %v1580
        %1625 = vmatprep.subr.bf16.mxu0 %v1583
        %1626 = vmatpush1.bf16.xpose.msra.mxu0 %v1582
        %1627 = vmatprep.subr.bf16.mxu0 0
        %1628 = vmatpush1.bf16.xpose.msra.mxu0 0
        %1629 = vmatprep.subr.bf16.mxu0 0
        %1630 = vmatpush1.bf16.xpose.msra.mxu0 0
        %1631 = vmatprep.subr.bf16.mxu0 0
        %1632 = vmatpush1.bf16.xpose.msra.mxu0 0
        %1633 = vmatprep.subr.bf16.mxu0 0
        %1634 = vmatpush1.bf16.xpose.msra.mxu0 0
        %1635 = vmatprep.subr.bf16.mxu0 0
        %1636 = vmatpush1.bf16.xpose.msra.mxu0 0
        %1637 = vmatprep.subr.bf16.mxu0 0
        %1638 = vmatpush1.bf16.xpose.msra.mxu0 0
        %1639 = vmatprep.subr.bf16.mxu0 0
        %1640 = vmatpush1.bf16.xpose.msra.mxu0 0
        %1641 = vmatprep.subr.bf16.mxu0 0
        %1642 = vmatpush1.bf16.xpose.msra.mxu0 0
        %1643 = vmatprep.mubr.bf16.mxu0 %v1608
        %1644 = vmatmul.mubr.bf16.gmra.mrb[0].mxu0 %v1601
        %v1645 = vpop.f32.mrb[0].mxu0
        %v1646 = vadd.f32 %v1585, %v1645
        %v1647 = vpop.f32.mrb[0].mxu0
        %v1648 = vpop.f32.mrb[0].mxu0
        %v1649 = vpop.f32.mrb[0].mxu0
        %1650 = vdwg.mxu0
        %v1651 = vlaneseq
        %v1652 = vand.u32 %v1651, 127
        %s1653 = smul.u32 %s27, 128
        %v1654 = vstv %s1653
        %v1655 = vadd.s32 %v1652, %v1654
        %vm1656 = vcmp.lt.s32.totalorder %v1655, 300
        %v1657 = vsel %vm1656, %v1646, -1e+30
        %s1658 = scalar_lea.vmem [#allocation13], %s27
        %1659 = vst [vmem:[%s1658] sm:$0x1] %v1657
        %v1660 = vld [vmem:[#allocation2] sm:$0x1]
        %vm1661 = vcmask 1040384
        %v1662 = vsel %vm1661, %v1657, -inf
        %1663 = vmax.xlane.f32.xlu0 %v1662
        %v1664 = vpop.xlane.xlu0 %1663
        %v1665 = vmax.f32 %v1660, %v1664
        %v1666 = vsub.f32 %v1660, %v1665
        %v1667 = vmul.f32 %v1666, 1.442695
        %v1668 = vpow.pop %v1667
        %1670 = vset.pattern.permute.xlu0 0
        %1671 = vperm.xlu0 %1670, %v1665
        %v1672 = vpop.permute.xlu0 %1671
        %v1674 = vlaneseq
        %v1675 = vshrl.u32 %v1674, 7
        %v1676 = vsub.s32 0, %v1675
        %v1677 = vrot.slane %v1672, %v1676
        %v1678 = vsub.f32 %v1657, %v1677
        %v1679 = vmul.f32 %v1678, 1.442695
        %v1680 = vpow.pop %v1679
        %v1681 = vld [vmem:[#allocation3] sm:$0x1]
        %v1682 = vmul.f32 %v1668, %v1681
        %v1683 = vsel %vm1661, %v1680, 0.0
        %1684 = vadd.xlane.f32.xlu0 %v1683
        %v1685 = vpop.xlane.xlu0 %1684
        %v1686 = vadd.f32 %v1682, %v1685
        %vm1687 = vcmask 0
        %1688 = vst.msk [vmem:[#allocation3] sm:$0x1] %vm1687, %v1686
        %v1689 = vld [vmem:[#allocation4] sm:$0x3]
        %1691 = vset.pattern.permute.xlu0 0
        %1692 = vperm.xlu0 %1691, %v1668
        %v1693 = vpop.permute.xlu0 %1692
        %v1695 = vlaneseq
        %v1696 = vshrl.u32 %v1695, 7
        %v1697 = vsub.s32 0, %v1696
        %v1698 = vrot.slane %v1693, %v1697
        %v1699 = vmul.f32 %v1698, %v1689
        %1700 = vmatprep.subr.mxu0 %v1171
        %1701 = vmatpush1.msra.mxu0 %v1170
        %1702 = vmatprep.subr.mxu0 %v1173
        %1703 = vmatpush1.msra.mxu0 %v1172
        %1704 = vmatprep.subr.mxu0 %v1175
        %1705 = vmatpush1.msra.mxu0 %v1174
        %1706 = vmatprep.subr.mxu0 %v1177
        %1707 = vmatpush1.msra.mxu0 %v1176
        %1708 = vmatprep.subr.mxu0 %v1179
        %1709 = vmatpush1.msra.mxu0 %v1178
        %1710 = vmatprep.subr.mxu0 %v1181
        %1711 = vmatpush1.msra.mxu0 %v1180
        %1712 = vmatprep.subr.mxu0 %v1183
        %1713 = vmatpush1.msra.mxu0 %v1182
        %1714 = vmatprep.subr.mxu0 %v1185
        %1715 = vmatpush1.msra.mxu0 %v1184
        %1716 = vmatprep.subr.mxu0 %v1187
        %1717 = vmatpush1.msra.mxu0 %v1186
        %1718 = vmatprep.subr.mxu0 %v1189
        %1719 = vmatpush1.msra.mxu0 %v1188
        %1720 = vmatprep.subr.mxu0 %v1191
        %1721 = vmatpush1.msra.mxu0 %v1190
        %1722 = vmatprep.subr.mxu0 %v1193
        %1723 = vmatpush1.msra.mxu0 %v1192
        %1724 = vmatprep.subr.mxu0 %v1195
        %1725 = vmatpush1.msra.mxu0 %v1194
        %1726 = vmatprep.subr.mxu0 %v1197
        %1727 = vmatpush1.msra.mxu0 %v1196
        %1728 = vmatprep.subr.mxu0 %v1199
        %1729 = vmatpush1.msra.mxu0 %v1198
        %1730 = vmatprep.subr.mxu0 %v1201
        %1731 = vmatpush1.msra.mxu0 %v1200
        %1732 = vmatprep.subr.mxu0 0.0
        %1733 = vmatpush1.msra.mxu0 0.0
        %1734 = vmatprep.subr.mxu0 0.0
        %1735 = vmatpush1.msra.mxu0 0.0
        %1736 = vmatprep.subr.mxu0 0.0
        %1737 = vmatpush1.msra.mxu0 0.0
        %1738 = vmatprep.subr.mxu0 0.0
        %1739 = vmatpush1.msra.mxu0 0.0
        %1740 = vmatprep.subr.mxu0 0.0
        %1741 = vmatpush1.msra.mxu0 0.0
        %1742 = vmatprep.subr.mxu0 0.0
        %1743 = vmatpush1.msra.mxu0 0.0
        %1744 = vmatprep.subr.mxu0 0.0
        %1745 = vmatpush1.msra.mxu0 0.0
        %1746 = vmatprep.subr.mxu0 0.0
        %1747 = vmatpush1.msra.mxu0 0.0
        %1748 = vmatprep.subr.mxu0 0.0
        %1749 = vmatpush1.msra.mxu0 0.0
        %1750 = vmatprep.subr.mxu0 0.0
        %1751 = vmatpush1.msra.mxu0 0.0
        %1752 = vmatprep.subr.mxu0 0.0
        %1753 = vmatpush1.msra.mxu0 0.0
        %1754 = vmatprep.subr.mxu0 0.0
        %1755 = vmatpush1.msra.mxu0 0.0
        %1756 = vmatprep.subr.mxu0 0.0
        %1757 = vmatpush1.msra.mxu0 0.0
        %1758 = vmatprep.subr.mxu0 0.0
        %1759 = vmatpush1.msra.mxu0 0.0
        %1760 = vmatprep.subr.mxu0 0.0
        %1761 = vmatpush1.msra.mxu0 0.0
        %1762 = vmatprep.subr.mxu0 0.0
        %1763 = vmatpush1.msra.mxu0 0.0
        %1764 = vmatprep.mubr.f32.mxu0 0.0
        %1765 = vmatmul.mubr.f32.gmra.mrb[0].mxu0 %v1680
        %v1766 = vpop.f32.mrb[0].mxu0
        %v1767 = vadd.f32 0.0, %v1766
        %v1768 = vpop.f32.mrb[0].mxu0
        %v1769 = vadd.f32 0.0, %v1768
        %1770 = vdwg.mxu0
        %v1773 = vcombine.low %v1767, %v1769
        %v1775 = vunpack.c.l.s4 1966171168
        %v1776 = vunpack.c.0.s8 %v1775
        %v1777 = vlaneseq
        %v1778 = vshrl.u32 %v1777, 7
        %v1779 = vsub.s32 %v1776, %v1778
        %v1780 = vrot.slane %v1773, %v1779
        %v1782 = vunpack.c.l.s4 1966171168
        %v1783 = vunpack.c.0.s8 %v1782
        %v1784 = vlaneseq
        %v1785 = vshrl.u32 %v1784, 7
        %v1786 = vsub.s32 %v1783, %v1785
        %v1787 = vrot.slane %v1780, %v1786
        %v1789 = vadd.f32 %v1699, %v1787
        %v1790 = vlaneseq
        %vm1791 = vcmp.ge.s32.totalorder %v1790, 0
        %vm1792 = vcmp.lt.s32.totalorder %v1790, 256
        %vm1793 = vmand %vm1791, %vm1792
        %1794 = vst.msk [vmem:[#allocation4] sm:$0x3] %vm1793, %v1789
        %1795 = vst.msk [vmem:[#allocation2] sm:$0x1] %vm1687, %v1665
        %p1796 = scmp.eq.s32.totalorder %s27, 2
        // Predicated region
        $region65: #{tpu_custom_call.1} parent=47 // pred_check
          %p1797 = pneg %p1796
        $region66: #{tpu_custom_call.1} parent=47 // pred_check_branch
          %1799 = sbr.rel (%p1797) target = $region68
        $region67: #{tpu_custom_call.1} parent=47 // pred_region
          %v1800 = vld [vmem:[#allocation3] sm:$0x1]
          %v1801 = vrcp.pop %v1800
          %v1802 = vmul.f32 1.0, %v1801
          %v1803 = vld [vmem:[#allocation4] sm:$0x3]
          %1805 = vset.pattern.permute.xlu0 0
          %1806 = vperm.xlu0 %1805, %v1802
          %v1807 = vpop.permute.xlu0 %1806
          %v1809 = vlaneseq
          %v1810 = vshrl.u32 %v1809, 7
          %v1811 = vsub.s32 0, %v1810
          %v1812 = vrot.slane %v1807, %v1811
          %v1813 = vmul.f32 %v1803, %v1812
          %1814 = vst.msk [vmem:[#allocation12] sm:$0x3] %vm1793, %v1813
          %v1815 = vld [vmem:[#allocation13] sm:$0x7]
          %v1816 = vld [vmem:[#allocation2] sm:$0x1]
          %v1818 = vlaneseq
          %v1819 = vshrl.u32 %v1818, 7
          %v1820 = vsub.s32 0, %v1819
          %v1821 = vrot.slane %v1816, %v1820
          %1822 = vset.pattern.permute.xlu0 0
          %1823 = vperm.xlu0 %1822, %v1821
          %v1824 = vpop.permute.xlu0 %1823
          %v1826 = vsub.f32 %v1815, %v1824
          %v1827 = vmul.f32 %v1826, 1.442695
          %v1828 = vpow.pop %v1827
          %v1829 = vlaneseq
          %v1830 = vshrl.u32 %v1829, 7
          %v1831 = vsub.s32 0, %v1830
          %v1832 = vrot.slane %v1802, %v1831
          %1833 = vset.pattern.permute.xlu0 0
          %1834 = vperm.xlu0 %1833, %v1832
          %v1835 = vpop.permute.xlu0 %1834
          %v1837 = vmul.f32 %v1828, %v1835
          %1838 = vst [vmem:[#allocation13] sm:$0x7] %v1837
        $region68: #{tpu_custom_call.1} parent=47 // pred_fallthru
          _
        // Predicated region
        $region69: #{tpu_custom_call.1} parent=47 // pred_check
          %p1839 = pneg %p192
        $region70: #{tpu_custom_call.1} parent=47 // pred_check_branch
          %1841 = sbr.rel (%p1839) target = $region72
        $region71: #{tpu_custom_call.1} parent=47 // pred_region
          %s1843 = ssub.s32 32, 32
          %1844 = vsyncadd [#allocation8], %s1843
          %s1846 = sshll.u32 [#allocation12], 4
          %s1847 = int_to_ptr.vmem [resolvable:$true] %s1846
          %1849 = dma.vmem_to_hbm [thread:$0]  %s1847, 32, %s7, [#allocation8]
        $region72: #{tpu_custom_call.1} parent=47 // pred_fallthru
          _
        // Predicated region
        $region73: #{tpu_custom_call.1} parent=47 // pred_check
          %p1850 = pneg %p213
        $region74: #{tpu_custom_call.1} parent=47 // pred_check_branch
          %1852 = sbr.rel (%p1850) target = $region76
        $region75: #{tpu_custom_call.1} parent=47 // pred_region
          %s1854 = ssub.s32 64, 64
          %1855 = vsyncadd [#allocation14], %s1854
          %s1857 = sshll.u32 [#allocation13], 4
          %s1858 = int_to_ptr.vmem [resolvable:$true] %s1857
          %1860 = dma.vmem_to_hbm [thread:$0]  %s1858, 64, %s8, [#allocation14]
        $region76: #{tpu_custom_call.1} parent=47 // pred_fallthru
          _
        // Predicated region
        $region77: #{tpu_custom_call.1} parent=47 // pred_check
          %p1861 = pneg %p192
        $region78: #{tpu_custom_call.1} parent=47 // pred_check_branch
          %1863 = sbr.rel (%p1861) target = $region80
        $region79: #{tpu_custom_call.1} parent=47 // pred_region
          %1864 = dma.done [#allocation8], 32
        $region80: #{tpu_custom_call.1} parent=47 // pred_fallthru
          _
        // Predicated region
        $region81: #{tpu_custom_call.1} parent=47 // pred_check
          %p1865 = pneg %p213
        $region82: #{tpu_custom_call.1} parent=47 // pred_check_branch
          %1867 = sbr.rel (%p1865) target = $region84
        $region83: #{tpu_custom_call.1} parent=47 // pred_region
          %1868 = dma.done [#allocation14], 64
        $region84: #{tpu_custom_call.1} parent=47 // pred_fallthru
          _
      $region48: #{tpu_custom_call.1} parent=5 // pred_fallthru
        _
      %p1869 = scmp.le.s32.totalorder 2, %s22
      // Predicated region
      $region85: #{tpu_custom_call.1} parent=5 // pred_check
        %p1870 = pneg %p1869
      $region86: #{tpu_custom_call.1} parent=5 // pred_check_branch
        %1872 = sbr.rel (%p1870) target = $region88
      $region87: #{tpu_custom_call.1} parent=5 // pred_region
        %s1873 = ssub.s32 %s22, 2
      $region88: #{tpu_custom_call.1} parent=5 // pred_fallthru
        _
    $region6: #{tpu_custom_call.1} parent=1 // loop_footer
      %s26 = sadd.s32 1, %s22
    $region7: #{tpu_custom_call.1} parent=1 // loop_footer_branch
      %21 = sbr.rel target = $region3
    $region8: #{tpu_custom_call.1} parent=1 // loop_exit
      _
    %1874 = vsyncpa [#allocation7], 1
    %s1875 = scalar_lea.sflag [#allocation7], 1
    %1876 = vsyncpa %s1875, 1
    %1877 = vsyncpa [#allocation10], 1
    %1878 = vsyncpa [#allocation8], 1
    %s1879 = scalar_lea.sflag [#allocation8], 1
    %1880 = vsyncpa %s1879, 1
    %1881 = vsyncpa [#allocation14], 1

</llo_original>
